<compile_context>
chip_gen: v7x
topology: tpu7x:2x2x1
jax: 0.10.0
libtpu: 0.0.40
codegen_flags: <defaults>
</compile_context>

<pallas_src>
import jax
import jax.numpy as jnp
from jax.experimental import pallas as pl
from jax.experimental.pallas import tpu as pltpu

LANE = 128
IN_DIM = 28 * 28          # 784  (kept un-padded: block covers the full row)
FEAT_DIM = 26 * 26        # 676
OUT_DIM = 10
OUT_PAD = 128             # 10 padded to 128 (lane-dense final store)
HIDDEN = (128, 512, 256)


def _round_up(n: int, m: int) -> int:
    return ((n + m - 1) // m) * m


def _pick_tm(batch: int) -> int:
    """Adaptive batch tile: tiny batches don't pad to 256; big batches get
    >=2 tiles (both v7x TensorCores), each a multiple of 128, capped at 512."""
    b8 = _round_up(batch, 8)
    if b8 <= 256:
        return b8
    half = _round_up((b8 + 1) // 2, LANE)
    return min(512, half)


# ----------------------------------------------------------------------------
# Host-side fold of the (linear) convolution into fc1.
# ----------------------------------------------------------------------------
def build_conv_matrix(conv_w):
    """(3,3) conv weight -> C with shape (784, 676) such that
    flatten(valid_conv3x3(img)) == img.reshape(784) @ C  (row-major flatten)."""
    C = jnp.zeros((28, 28, 26, 26), jnp.float32)
    r = jnp.arange(26)
    for di in range(3):
        Sr = jnp.zeros((28, 26), jnp.float32).at[r + di, r].set(1.0)
        for dj in range(3):
            Sc = jnp.zeros((28, 26), jnp.float32).at[r + dj, r].set(1.0)
            C = C + conv_w[di, dj] * (Sr[:, None, :, None] * Sc[None, :, None, :])
    return C.reshape(IN_DIM, FEAT_DIM)


def fold_params(conv_w, params):
    """Fold conv into w1 (exact, f32 HIGHEST), pad only the output dim, then
    cast weights to bf16 for HBM/MXU efficiency. Biases stay f32."""
    w1, b1, w2, b2, w3, b3, w4, b4 = params
    C = build_conv_matrix(conv_w)                                    # (784, 676)
    w1_eff = jnp.dot(C, w1, precision=jax.lax.Precision.HIGHEST)     # (784, 128)
    w4_p = jnp.pad(w4, ((0, 0), (0, OUT_PAD - OUT_DIM)))             # (256, 128)
    b4_p = jnp.pad(b4, ((0, 0), (0, OUT_PAD - OUT_DIM)))             # (1, 128)
    bf = jnp.bfloat16
    return (w1_eff.astype(bf), b1.astype(jnp.float32),
            w2.astype(bf), b2.astype(jnp.float32),
            w3.astype(bf), b3.astype(jnp.float32),
            w4_p.astype(bf), b4_p.astype(jnp.float32))


# ----------------------------------------------------------------------------
# Fused 4-layer MLP kernel: one (TM, 784) bf16 batch tile per grid step,
# weights resident in VMEM across all steps, f32 accumulation throughout.
# ----------------------------------------------------------------------------
def _fused_mlp_kernel(x_ref, w1, b1, w2, b2, w3, b3, w4, b4, o_ref):
    h = jnp.dot(x_ref[...], w1[...], preferred_element_type=jnp.float32) + b1[...]
    h = jnp.maximum(h, 0.0).astype(jnp.bfloat16)
    h = jnp.dot(h, w2[...], preferred_element_type=jnp.float32) + b2[...]
    h = jnp.maximum(h, 0.0).astype(jnp.bfloat16)
    h = jnp.dot(h, w3[...], preferred_element_type=jnp.float32) + b3[...]
    h = jnp.maximum(h, 0.0).astype(jnp.bfloat16)
    o_ref[...] = jnp.dot(h, w4[...], preferred_element_type=jnp.float32) + b4[...]


def fused_forward(x, fused_params):
    """x: (B, 784) -> logits (B, 10). One fused pallas_call, batch-tiled."""
    B = x.shape[0]
    TM = _pick_tm(B)
    n_tiles = pl.cdiv(B, TM)
    B_pad = n_tiles * TM

    # Only the batch dim is padded (features stay at 784); cast stream to bf16.
    x_p = jnp.pad(x.astype(jnp.bfloat16), ((0, B_pad - B), (0, 0)))

    # Grid-invariant weight/bias blocks: same block index every step -> stay
    # resident in VMEM, never re-fetched.
    weight_specs = [pl.BlockSpec(p.shape, lambda i: (0, 0)) for p in fused_params]

    flops = 2 * B_pad * (IN_DIM * HIDDEN[0] + HIDDEN[0] * HIDDEN[1]
                         + HIDDEN[1] * HIDDEN[2] + HIDDEN[2] * OUT_PAD)
    bytes_accessed = (2 * B_pad * IN_DIM                      # bf16 input
                      + 4 * B_pad * OUT_PAD                   # f32 output
                      + sum(int(p.size) * p.dtype.itemsize for p in fused_params))

    out = pl.pallas_call(
        _fused_mlp_kernel,
        out_shape=jax.ShapeDtypeStruct((B_pad, OUT_PAD), jnp.float32),
        grid=(n_tiles,),
        in_specs=[pl.BlockSpec((TM, IN_DIM), lambda i: (i, 0))] + weight_specs,
        out_specs=pl.BlockSpec((TM, OUT_PAD), lambda i: (i, 0)),
        compiler_params=pltpu.CompilerParams(
            dimension_semantics=("parallel",),      # shard batch tiles across TCs
            vmem_limit_bytes=32 * 1024 * 1024,
        ),
        cost_estimate=pl.CostEstimate(flops=flops, transcendentals=0,
                                      bytes_accessed=bytes_accessed),
    )(x_p, *fused_params)

    return out[:B, :OUT_DIM]


# ----------------------------------------------------------------------------
# Full model forward (matches DigitConvolutionalModel.forward semantics).
# ----------------------------------------------------------------------------
def digit_conv_model_forward(x, conv_w, params):
    fused = fold_params(conv_w, params)
    return fused_forward(x, fused)


# ----------------------------------------------------------------------------
# Parameter init (deterministic, synthetic — shapes from the module __init__).
# Conv weights = ones((3,3)) exactly as in __init__; Linear layers use
# PyTorch-default-style uniform(+-1/sqrt(fan_in)) from PRNGKey(0). Biases are
# kept 2-D (1, fan_out) for clean in-kernel broadcasting.
# ----------------------------------------------------------------------------
def init_params():
    conv_w = jnp.ones((3, 3), jnp.float32)
    key = jax.random.PRNGKey(0)
    dims = [(FEAT_DIM, 128), (128, 512), (512, 256), (256, OUT_DIM)]
    params = []
    for (fan_in, fan_out) in dims:
        key, kw, kb = jax.random.split(key, 3)
        bound = 1.0 / jnp.sqrt(jnp.float32(fan_in))
        w = jax.random.uniform(kw, (fan_in, fan_out), jnp.float32, -bound, bound)
        b = jax.random.uniform(kb, (1, fan_out), jnp.float32, -bound, bound)
        params += [w, b]
    return conv_w, tuple(params)


# ----------------------------------------------------------------------------
# Pure-JAX reference (un-folded: explicit conv then MLP) for correctness check.
# ----------------------------------------------------------------------------
def reference_forward(x, conv_w, params):
    B = x.shape[0]
    imgs = x.reshape(B, 28, 28).astype(jnp.float32)
    acc = jnp.zeros((B, 26, 26), jnp.float32)
    for di in range(3):
        for dj in range(3):
            acc = acc + conv_w[di, dj] * imgs[:, di:di + 26, dj:dj + 26]
    h = acc.reshape(B, FEAT_DIM)
    w1, b1, w2, b2, w3, b3, w4, b4 = params
    hp = jax.lax.Precision.HIGHEST
    h = jax.nn.relu(jnp.dot(h, w1, precision=hp) + b1)
    h = jax.nn.relu(jnp.dot(h, w2, precision=hp) + b2)
    h = jax.nn.relu(jnp.dot(h, w3, precision=hp) + b3)
    return jnp.dot(h, w4, precision=hp) + b4


if __name__ == "__main__":
    conv_w, params = init_params()

    # Small deterministic batch of "digits": (batch=2, 784) as forward implies.
    x = jax.random.normal(jax.random.PRNGKey(0), (2, IN_DIM), jnp.float32)

    logits = digit_conv_model_forward(x, conv_w, params)
    logits = jax.block_until_ready(logits)

    ref = reference_forward(x, conv_w, params)
    assert logits.shape == (2, OUT_DIM) and logits.dtype == jnp.float32
    # Fold is mathematically exact; tolerance covers bf16 operand rounding
    # (f32 accumulation) vs. the HIGHEST-precision f32 reference.
    assert jnp.allclose(logits, ref, rtol=3e-2, atol=3e-2), (
        f"max abs err {jnp.max(jnp.abs(logits - ref))}")

    # TODO(synk): get_loss / train (CrossEntropyLoss, Adam loop) are host-side
    # training utilities, not part of the forward hot path — not kernelized.
    print("KERNEL_OK")
</pallas_src>

<mosaic_0001>
module attributes {stable_mosaic.version = 11 : i64} {
  func.func @_fused_mlp_kernel(%arg0: i32, %arg1: memref<8x784xbf16, #tpu.memory_space<vmem>>, %arg2: memref<784x128xbf16, #tpu.memory_space<vmem>>, %arg3: memref<1x128xf32, #tpu.memory_space<vmem>>, %arg4: memref<128x512xbf16, #tpu.memory_space<vmem>>, %arg5: memref<1x512xf32, #tpu.memory_space<vmem>>, %arg6: memref<512x256xbf16, #tpu.memory_space<vmem>>, %arg7: memref<1x256xf32, #tpu.memory_space<vmem>>, %arg8: memref<256x128xbf16, #tpu.memory_space<vmem>>, %arg9: memref<1x128xf32, #tpu.memory_space<vmem>>, %arg10: memref<8x128xf32, #tpu.memory_space<vmem>>) attributes {dimension_semantics = [#tpu.dimension_semantics<parallel>], iteration_bounds = array<i64: 1>, scalar_prefetch = 0 : i64, scratch_operands = 0 : i64, tpu.core_type = #tpu.core_type<tc>, window_params = [{transform_indices = @transform_0, window_bounds = array<i64: 8, 784>}, {pipeline_mode = #tpu.pipeline_mode<synchronous>, transform_indices = @transform_1, window_bounds = array<i64: 784, 128>}, {pipeline_mode = #tpu.pipeline_mode<synchronous>, transform_indices = @transform_2, window_bounds = array<i64: 1, 128>}, {pipeline_mode = #tpu.pipeline_mode<synchronous>, transform_indices = @transform_3, window_bounds = array<i64: 128, 512>}, {pipeline_mode = #tpu.pipeline_mode<synchronous>, transform_indices = @transform_4, window_bounds = array<i64: 1, 512>}, {pipeline_mode = #tpu.pipeline_mode<synchronous>, transform_indices = @transform_5, window_bounds = array<i64: 512, 256>}, {pipeline_mode = #tpu.pipeline_mode<synchronous>, transform_indices = @transform_6, window_bounds = array<i64: 1, 256>}, {pipeline_mode = #tpu.pipeline_mode<synchronous>, transform_indices = @transform_7, window_bounds = array<i64: 256, 128>}, {pipeline_mode = #tpu.pipeline_mode<synchronous>, transform_indices = @transform_8, window_bounds = array<i64: 1, 128>}, {transform_indices = @transform_9, window_bounds = array<i64: 8, 128>}]} {
    %c0 = arith.constant 0 : index
    %c0_0 = arith.constant 0 : index
    %0 = vector.load %arg1[%c0, %c0_0] : memref<8x784xbf16, #tpu.memory_space<vmem>>, vector<8x784xbf16>
    %c0_1 = arith.constant 0 : index
    %c0_2 = arith.constant 0 : index
    %1 = vector.load %arg2[%c0_1, %c0_2] : memref<784x128xbf16, #tpu.memory_space<vmem>>, vector<784x128xbf16>
    %cst = arith.constant dense<0.000000e+00> : vector<8x128xf32>
    %2 = tpu.matmul %0, %1, %cst {dimension_numbers = #tpu.dot_dimension_numbers<[1], [0], [0], [1], [0, 0, 1, 1], [], []>} : vector<8x784xbf16>, vector<784x128xbf16>, vector<8x128xf32> -> vector<8x128xf32>
    %c0_3 = arith.constant 0 : index
    %c0_4 = arith.constant 0 : index
    %3 = vector.load %arg3[%c0_3, %c0_4] : memref<1x128xf32, #tpu.memory_space<vmem>>, vector<1x128xf32>
    %4 = vector.broadcast %3 : vector<1x128xf32> to vector<8x128xf32>
    %5 = arith.addf %2, %4 : vector<8x128xf32>
    %cst_5 = arith.constant 0.000000e+00 : f32
    %6 = vector.broadcast %cst_5 : f32 to vector<8x128xf32>
    %7 = arith.maximumf %5, %6 : vector<8x128xf32>
    %8 = arith.truncf %7 : vector<8x128xf32> to vector<8x128xbf16>
    %c0_6 = arith.constant 0 : index
    %c0_7 = arith.constant 0 : index
    %9 = vector.load %arg4[%c0_6, %c0_7] : memref<128x512xbf16, #tpu.memory_space<vmem>>, vector<128x512xbf16>
    %cst_8 = arith.constant dense<0.000000e+00> : vector<8x512xf32>
    %10 = tpu.matmul %8, %9, %cst_8 {dimension_numbers = #tpu.dot_dimension_numbers<[1], [0], [0], [1], [0, 0, 1, 1], [], []>} : vector<8x128xbf16>, vector<128x512xbf16>, vector<8x512xf32> -> vector<8x512xf32>
    %c0_9 = arith.constant 0 : index
    %c0_10 = arith.constant 0 : index
    %11 = vector.load %arg5[%c0_9, %c0_10] : memref<1x512xf32, #tpu.memory_space<vmem>>, vector<1x512xf32>
    %12 = vector.broadcast %11 : vector<1x512xf32> to vector<8x512xf32>
    %13 = arith.addf %10, %12 : vector<8x512xf32>
    %cst_11 = arith.constant 0.000000e+00 : f32
    %14 = vector.broadcast %cst_11 : f32 to vector<8x512xf32>
    %15 = arith.maximumf %13, %14 : vector<8x512xf32>
    %16 = arith.truncf %15 : vector<8x512xf32> to vector<8x512xbf16>
    %c0_12 = arith.constant 0 : index
    %c0_13 = arith.constant 0 : index
    %17 = vector.load %arg6[%c0_12, %c0_13] : memref<512x256xbf16, #tpu.memory_space<vmem>>, vector<512x256xbf16>
    %cst_14 = arith.constant dense<0.000000e+00> : vector<8x256xf32>
    %18 = tpu.matmul %16, %17, %cst_14 {dimension_numbers = #tpu.dot_dimension_numbers<[1], [0], [0], [1], [0, 0, 1, 1], [], []>} : vector<8x512xbf16>, vector<512x256xbf16>, vector<8x256xf32> -> vector<8x256xf32>
    %c0_15 = arith.constant 0 : index
    %c0_16 = arith.constant 0 : index
    %19 = vector.load %arg7[%c0_15, %c0_16] : memref<1x256xf32, #tpu.memory_space<vmem>>, vector<1x256xf32>
    %20 = vector.broadcast %19 : vector<1x256xf32> to vector<8x256xf32>
    %21 = arith.addf %18, %20 : vector<8x256xf32>
    %cst_17 = arith.constant 0.000000e+00 : f32
    %22 = vector.broadcast %cst_17 : f32 to vector<8x256xf32>
    %23 = arith.maximumf %21, %22 : vector<8x256xf32>
    %24 = arith.truncf %23 : vector<8x256xf32> to vector<8x256xbf16>
    %c0_18 = arith.constant 0 : index
    %c0_19 = arith.constant 0 : index
    %25 = vector.load %arg8[%c0_18, %c0_19] : memref<256x128xbf16, #tpu.memory_space<vmem>>, vector<256x128xbf16>
    %cst_20 = arith.constant dense<0.000000e+00> : vector<8x128xf32>
    %26 = tpu.matmul %24, %25, %cst_20 {dimension_numbers = #tpu.dot_dimension_numbers<[1], [0], [0], [1], [0, 0, 1, 1], [], []>} : vector<8x256xbf16>, vector<256x128xbf16>, vector<8x128xf32> -> vector<8x128xf32>
    %c0_21 = arith.constant 0 : index
    %c0_22 = arith.constant 0 : index
    %27 = vector.load %arg9[%c0_21, %c0_22] : memref<1x128xf32, #tpu.memory_space<vmem>>, vector<1x128xf32>
    %28 = vector.broadcast %27 : vector<1x128xf32> to vector<8x128xf32>
    %29 = arith.addf %26, %28 : vector<8x128xf32>
    %c0_23 = arith.constant 0 : index
    %c0_24 = arith.constant 0 : index
    %30 = vector.load %arg10[%c0_23, %c0_24] : memref<8x128xf32, #tpu.memory_space<vmem>>, vector<8x128xf32>
    tpu.vector_store %arg10[%c0_23, %c0_24], %29 {strides = array<i32>} : memref<8x128xf32, #tpu.memory_space<vmem>>, vector<8x128xf32>,
    return
  }
  func.func @transform_0(%arg0: i32) -> (i32, i32) {
    %c0_i32 = arith.constant 0 : i32
    %c0_i32_0 = arith.constant 0 : i32
    return %arg0, %c0_i32 : i32, i32
  }
  func.func @transform_1(%arg0: i32) -> (i32, i32) {
    %c0_i32 = arith.constant 0 : i32
    %c0_i32_0 = arith.constant 0 : i32
    %c0_i32_1 = arith.constant 0 : i32
    return %c0_i32, %c0_i32_0 : i32, i32
  }
  func.func @transform_2(%arg0: i32) -> (i32, i32) {
    %c0_i32 = arith.constant 0 : i32
    %c0_i32_0 = arith.constant 0 : i32
    %c0_i32_1 = arith.constant 0 : i32
    return %c0_i32, %c0_i32_0 : i32, i32
  }
  func.func @transform_3(%arg0: i32) -> (i32, i32) {
    %c0_i32 = arith.constant 0 : i32
    %c0_i32_0 = arith.constant 0 : i32
    %c0_i32_1 = arith.constant 0 : i32
    return %c0_i32, %c0_i32_0 : i32, i32
  }
  func.func @transform_4(%arg0: i32) -> (i32, i32) {
    %c0_i32 = arith.constant 0 : i32
    %c0_i32_0 = arith.constant 0 : i32
    %c0_i32_1 = arith.constant 0 : i32
    return %c0_i32, %c0_i32_0 : i32, i32
  }
  func.func @transform_5(%arg0: i32) -> (i32, i32) {
    %c0_i32 = arith.constant 0 : i32
    %c0_i32_0 = arith.constant 0 : i32
    %c0_i32_1 = arith.constant 0 : i32
    return %c0_i32, %c0_i32_0 : i32, i32
  }
  func.func @transform_6(%arg0: i32) -> (i32, i32) {
    %c0_i32 = arith.constant 0 : i32
    %c0_i32_0 = arith.constant 0 : i32
    %c0_i32_1 = arith.constant 0 : i32
    return %c0_i32, %c0_i32_0 : i32, i32
  }
  func.func @transform_7(%arg0: i32) -> (i32, i32) {
    %c0_i32 = arith.constant 0 : i32
    %c0_i32_0 = arith.constant 0 : i32
    %c0_i32_1 = arith.constant 0 : i32
    return %c0_i32, %c0_i32_0 : i32, i32
  }
  func.func @transform_8(%arg0: i32) -> (i32, i32) {
    %c0_i32 = arith.constant 0 : i32
    %c0_i32_0 = arith.constant 0 : i32
    %c0_i32_1 = arith.constant 0 : i32
    return %c0_i32, %c0_i32_0 : i32, i32
  }
  func.func @transform_9(%arg0: i32) -> (i32, i32) {
    %c0_i32 = arith.constant 0 : i32
    %c0_i32_0 = arith.constant 0 : i32
    return %arg0, %c0_i32 : i32, i32
  }
}

</mosaic_0001>

<llo_original>
// kernel: tpu_custom_call.1
$region0: #{tpu_custom_call.1}
  #allocation0 [shape = 'u32[]', space=smem, size = 0x4, offset = 0x4, fixed_abs, tag = 'smem constant byte address 0x4 - core index']
  #allocation1 [shape = 'u32[144,128]{1,0:T(1,128)}', space=vmem, size = 0x12000, scoped, tag = 'internal scratch']
  %s0 = inlined_call_operand.hbm [shape: bf16[8,784], index: 0, kind: input, shape index: {}]
  %s1 = inlined_call_operand.hbm [shape: bf16[784,128], index: 1, kind: input, shape index: {}]
  %s2 = inlined_call_operand.vmem [shape: f32[1,128], index: 2, kind: input, shape index: {}]
  %s3 = inlined_call_operand.hbm [shape: bf16[128,512], index: 3, kind: input, shape index: {}]
  %s4 = inlined_call_operand.vmem [shape: f32[1,512], index: 4, kind: input, shape index: {}]
  %s5 = inlined_call_operand.hbm [shape: bf16[512,256], index: 5, kind: input, shape index: {}]
  %s6 = inlined_call_operand.vmem [shape: f32[1,256], index: 6, kind: input, shape index: {}]
  %s7 = inlined_call_operand.hbm [shape: bf16[256,128], index: 7, kind: input, shape index: {}]
  %s8 = inlined_call_operand.vmem [shape: f32[1,128], index: 8, kind: input, shape index: {}]
  %s9 = inlined_call_operand.hbm [shape: f32[8,128], index: 9, kind: output, shape index: {}]
  %s10 = sld [smem:[#allocation0]]
  $region66: #{tpu_custom_call.1} parent=0
    _
  %s12 = ssub.s32 1, %s10
  %s13 = scalar_select 0, %s12, %s10
  $region1: #{tpu_custom_call.1} parent=0
    #allocation2 [shape = 'u8[14336]{0}', space=vmem, size = 0x3800, scoped, tag = 'input window, operand 0, single buffered']
    #allocation3 [shape = 's32[1]{0}', space=sflag, size = 0x4, scoped, tag = 'scoped memory for tpu_custom_call.1']
    #allocation4 [shape = 's32[1]{0}', space=sflag, size = 0x4, scoped, tag = 'scoped memory for tpu_custom_call.1']
    #allocation5 [shape = 'u8[200704]{0}', space=vmem, size = 0x31000, scoped, tag = 'input window, operand 1, single buffered']
    #allocation6 [shape = 's32[1]{0}', space=sflag, size = 0x4, scoped, tag = 'scoped memory for tpu_custom_call.1']
    #allocation7 [shape = 'u8[131072]{0}', space=vmem, size = 0x20000, scoped, tag = 'input window, operand 3, single buffered']
    #allocation8 [shape = 'u8[262144]{0}', space=vmem, size = 0x40000, scoped, tag = 'input window, operand 5, single buffered']
    #allocation9 [shape = 's32[1]{0}', space=sflag, size = 0x4, scoped, tag = 'scoped memory for tpu_custom_call.1']
    #allocation10 [shape = 'u8[65536]{0}', space=vmem, size = 0x10000, scoped, tag = 'input window, operand 7, single buffered']
    #allocation11 [shape = 'u8[4096]{0}', space=vmem, size = 0x1000, scoped, tag = 'output window, operand 0, single buffered']
    %14 = vsyncpa [#allocation3], 0
    %15 = vsyncpa [#allocation6], 0
    %16 = vsyncpa [#allocation9], 0
    %17 = vsyncpa [#allocation4], 0
    // Predicated region
    $region2: #{tpu_custom_call.1} parent=1 // pred_check
      _
    $region3: #{tpu_custom_call.1} parent=1 // pred_check_branch
      %19 = sbr.rel (0) target = $region5
    $region4: #{tpu_custom_call.1} parent=1 // pred_region
      %s21 = ssub.s32 448, 448
      %22 = vsyncadd [#allocation3], %s21
      %s24 = sshll.u32 [#allocation2], 4
      %s25 = int_to_ptr.vmem [resolvable:$true] %s24
      %27 = dma.hbm_to_vmem [thread:$0]  %s0, 448, %s25, [#allocation3]
    $region5: #{tpu_custom_call.1} parent=1 // pred_fallthru
      _
    // Predicated region
    $region6: #{tpu_custom_call.1} parent=1 // pred_check
      _
    $region7: #{tpu_custom_call.1} parent=1 // pred_check_branch
      %29 = sbr.rel (0) target = $region9
    $region8: #{tpu_custom_call.1} parent=1 // pred_region
      %s31 = ssub.s32 6272, 6272
      %32 = vsyncadd [#allocation6], %s31
      %s33 = sshll.u32 [#allocation5], 4
      %s34 = int_to_ptr.vmem [resolvable:$true] %s33
      %39 = dma.hbm_to_vmem [thread:$0]  %s1, 6272, %s34, [#allocation6], 64, 64, 4
    $region9: #{tpu_custom_call.1} parent=1 // pred_fallthru
      _
    // Predicated region
    $region10: #{tpu_custom_call.1} parent=1 // pred_check
      _
    $region11: #{tpu_custom_call.1} parent=1 // pred_check_branch
      %41 = sbr.rel (0) target = $region13
    $region12: #{tpu_custom_call.1} parent=1 // pred_region
      _
    $region13: #{tpu_custom_call.1} parent=1 // pred_fallthru
      _
    // Predicated region
    $region14: #{tpu_custom_call.1} parent=1 // pred_check
      _
    $region15: #{tpu_custom_call.1} parent=1 // pred_check_branch
      %43 = sbr.rel (0) target = $region17
    $region16: #{tpu_custom_call.1} parent=1 // pred_region
      %s45 = ssub.s32 4096, 4096
      %46 = vsyncadd [#allocation6], %s45
      %s47 = sshll.u32 [#allocation7], 4
      %s48 = int_to_ptr.vmem [resolvable:$true] %s47
      %53 = dma.hbm_to_vmem [thread:$0]  %s3, 4096, %s48, [#allocation6], 256, 256, 16
    $region17: #{tpu_custom_call.1} parent=1 // pred_fallthru
      _
    // Predicated region
    $region18: #{tpu_custom_call.1} parent=1 // pred_check
      _
    $region19: #{tpu_custom_call.1} parent=1 // pred_check_branch
      %55 = sbr.rel (0) target = $region21
    $region20: #{tpu_custom_call.1} parent=1 // pred_region
      _
    $region21: #{tpu_custom_call.1} parent=1 // pred_fallthru
      _
    // Predicated region
    $region22: #{tpu_custom_call.1} parent=1 // pred_check
      _
    $region23: #{tpu_custom_call.1} parent=1 // pred_check_branch
      %57 = sbr.rel (0) target = $region25
    $region24: #{tpu_custom_call.1} parent=1 // pred_region
      %s59 = ssub.s32 8192, 8192
      %60 = vsyncadd [#allocation9], %s59
      %s61 = sshll.u32 [#allocation8], 4
      %s62 = int_to_ptr.vmem [resolvable:$true] %s61
      %67 = dma.hbm_to_vmem [thread:$0]  %s5, 8192, %s62, [#allocation9], 128, 128, 8
    $region25: #{tpu_custom_call.1} parent=1 // pred_fallthru
      _
    // Predicated region
    $region26: #{tpu_custom_call.1} parent=1 // pred_check
      _
    $region27: #{tpu_custom_call.1} parent=1 // pred_check_branch
      %69 = sbr.rel (0) target = $region29
    $region28: #{tpu_custom_call.1} parent=1 // pred_region
      _
    $region29: #{tpu_custom_call.1} parent=1 // pred_fallthru
      _
    // Predicated region
    $region30: #{tpu_custom_call.1} parent=1 // pred_check
      _
    $region31: #{tpu_custom_call.1} parent=1 // pred_check_branch
      %71 = sbr.rel (0) target = $region33
    $region32: #{tpu_custom_call.1} parent=1 // pred_region
      %s73 = ssub.s32 2048, 2048
      %74 = vsyncadd [#allocation9], %s73
      %s75 = sshll.u32 [#allocation10], 4
      %s76 = int_to_ptr.vmem [resolvable:$true] %s75
      %81 = dma.hbm_to_vmem [thread:$0]  %s7, 2048, %s76, [#allocation9], 64, 64, 4
    $region33: #{tpu_custom_call.1} parent=1 // pred_fallthru
      _
    // Predicated region
    $region34: #{tpu_custom_call.1} parent=1 // pred_check
      _
    $region35: #{tpu_custom_call.1} parent=1 // pred_check_branch
      %83 = sbr.rel (0) target = $region37
    $region36: #{tpu_custom_call.1} parent=1 // pred_region
      _
    $region37: #{tpu_custom_call.1} parent=1 // pred_fallthru
      _
    // Predicated region
    $region38: #{tpu_custom_call.1} parent=1 // pred_check
      _
    $region39: #{tpu_custom_call.1} parent=1 // pred_check_branch
      %85 = sbr.rel (0) target = $region41
    $region40: #{tpu_custom_call.1} parent=1 // pred_region
      %86 = dma.done [#allocation3], 448
    $region41: #{tpu_custom_call.1} parent=1 // pred_fallthru
      _
    // Predicated region
    $region42: #{tpu_custom_call.1} parent=1 // pred_check
      _
    $region43: #{tpu_custom_call.1} parent=1 // pred_check_branch
      %88 = sbr.rel (0) target = $region45
    $region44: #{tpu_custom_call.1} parent=1 // pred_region
      %89 = dma.done [#allocation6], 6272
    $region45: #{tpu_custom_call.1} parent=1 // pred_fallthru
      _
    // Predicated region
    $region46: #{tpu_custom_call.1} parent=1 // pred_check
      _
    $region47: #{tpu_custom_call.1} parent=1 // pred_check_branch
      %91 = sbr.rel (0) target = $region49
    $region48: #{tpu_custom_call.1} parent=1 // pred_region
      %92 = dma.done [#allocation6], 4096
    $region49: #{tpu_custom_call.1} parent=1 // pred_fallthru
      _
    // Predicated region
    $region50: #{tpu_custom_call.1} parent=1 // pred_check
      _
    $region51: #{tpu_custom_call.1} parent=1 // pred_check_branch
      %94 = sbr.rel (0) target = $region53
    $region52: #{tpu_custom_call.1} parent=1 // pred_region
      %95 = dma.done [#allocation9], 8192
    $region53: #{tpu_custom_call.1} parent=1 // pred_fallthru
      _
    // Predicated region
    $region54: #{tpu_custom_call.1} parent=1 // pred_check
      _
    $region55: #{tpu_custom_call.1} parent=1 // pred_check_branch
      %97 = sbr.rel (0) target = $region57
    $region56: #{tpu_custom_call.1} parent=1 // pred_region
      %98 = dma.done [#allocation9], 2048
    $region57: #{tpu_custom_call.1} parent=1 // pred_fallthru
      _
    %v100 = vld [vmem:[#allocation2] sm:$0xff]
    %v101 = vld [vmem:[#allocation2 + $0x8] sm:$0xff]
    %v102 = vld [vmem:[#allocation2 + $0x10] sm:$0xff]
    %v103 = vld [vmem:[#allocation2 + $0x18] sm:$0xf]
    %v104 = vld [vmem:[#allocation5] sm:$0xf]
    %v105 = vld [vmem:[#allocation5 + $0x4] sm:$0xf]
    %v106 = vld [vmem:[#allocation5 + $0x8] sm:$0xf]
    %v107 = vld [vmem:[#allocation5 + $0xc] sm:$0xf]
    %v108 = vld [vmem:[#allocation5 + $0x10] sm:$0xf]
    %v109 = vld [vmem:[#allocation5 + $0x14] sm:$0xf]
    %v110 = vld [vmem:[#allocation5 + $0x18] sm:$0xf]
    %v111 = vld [vmem:[#allocation5 + $0x1c] sm:$0xf]
    %v112 = vld [vmem:[#allocation5 + $0x20] sm:$0xf]
    %v113 = vld [vmem:[#allocation5 + $0x24] sm:$0xf]
    %v114 = vld [vmem:[#allocation5 + $0x28] sm:$0xf]
    %v115 = vld [vmem:[#allocation5 + $0x2c] sm:$0xf]
    %v116 = vld [vmem:[#allocation5 + $0x30] sm:$0xf]
    %v117 = vld [vmem:[#allocation5 + $0x34] sm:$0xf]
    %v118 = vld [vmem:[#allocation5 + $0x38] sm:$0xf]
    %v119 = vld [vmem:[#allocation5 + $0x3c] sm:$0xf]
    %v120 = vld [vmem:[#allocation5 + $0x40] sm:$0xf]
    %v121 = vld [vmem:[#allocation5 + $0x44] sm:$0xf]
    %v122 = vld [vmem:[#allocation5 + $0x48] sm:$0xf]
    %v123 = vld [vmem:[#allocation5 + $0x4c] sm:$0xf]
    %v124 = vld [vmem:[#allocation5 + $0x50] sm:$0xf]
    %v125 = vld [vmem:[#allocation5 + $0x54] sm:$0xf]
    %v126 = vld [vmem:[#allocation5 + $0x58] sm:$0xf]
    %v127 = vld [vmem:[#allocation5 + $0x5c] sm:$0xf]
    %v128 = vld [vmem:[#allocation5 + $0x60] sm:$0xf]
    %v129 = vld [vmem:[#allocation5 + $0x64] sm:$0xf]
    %v130 = vld [vmem:[#allocation5 + $0x68] sm:$0xf]
    %v131 = vld [vmem:[#allocation5 + $0x6c] sm:$0xf]
    %v132 = vld [vmem:[#allocation5 + $0x70] sm:$0xf]
    %v133 = vld [vmem:[#allocation5 + $0x74] sm:$0xf]
    %v134 = vld [vmem:[#allocation5 + $0x78] sm:$0xf]
    %v135 = vld [vmem:[#allocation5 + $0x7c] sm:$0xf]
    %v136 = vld [vmem:[#allocation5 + $0x80] sm:$0xf]
    %v137 = vld [vmem:[#allocation5 + $0x84] sm:$0xf]
    %v138 = vld [vmem:[#allocation5 + $0x88] sm:$0xf]
    %v139 = vld [vmem:[#allocation5 + $0x8c] sm:$0xf]
    %v140 = vld [vmem:[#allocation5 + $0x90] sm:$0xf]
    %v141 = vld [vmem:[#allocation5 + $0x94] sm:$0xf]
    %v142 = vld [vmem:[#allocation5 + $0x98] sm:$0xf]
    %v143 = vld [vmem:[#allocation5 + $0x9c] sm:$0xf]
    %v144 = vld [vmem:[#allocation5 + $0xa0] sm:$0xf]
    %v145 = vld [vmem:[#allocation5 + $0xa4] sm:$0xf]
    %v146 = vld [vmem:[#allocation5 + $0xa8] sm:$0xf]
    %v147 = vld [vmem:[#allocation5 + $0xac] sm:$0xf]
    %v148 = vld [vmem:[#allocation5 + $0xb0] sm:$0xf]
    %v149 = vld [vmem:[#allocation5 + $0xb4] sm:$0xf]
    %v150 = vld [vmem:[#allocation5 + $0xb8] sm:$0xf]
    %v151 = vld [vmem:[#allocation5 + $0xbc] sm:$0xf]
    %v152 = vld [vmem:[#allocation5 + $0xc0] sm:$0xf]
    %v153 = vld [vmem:[#allocation5 + $0xc4] sm:$0xf]
    %v154 = vld [vmem:[#allocation5 + $0xc8] sm:$0xf]
    %v155 = vld [vmem:[#allocation5 + $0xcc] sm:$0xf]
    %v156 = vld [vmem:[#allocation5 + $0xd0] sm:$0xf]
    %v157 = vld [vmem:[#allocation5 + $0xd4] sm:$0xf]
    %v158 = vld [vmem:[#allocation5 + $0xd8] sm:$0xf]
    %v159 = vld [vmem:[#allocation5 + $0xdc] sm:$0xf]
    %v160 = vld [vmem:[#allocation5 + $0xe0] sm:$0xf]
    %v161 = vld [vmem:[#allocation5 + $0xe4] sm:$0xf]
    %v162 = vld [vmem:[#allocation5 + $0xe8] sm:$0xf]
    %v163 = vld [vmem:[#allocation5 + $0xec] sm:$0xf]
    %v164 = vld [vmem:[#allocation5 + $0xf0] sm:$0xf]
    %v165 = vld [vmem:[#allocation5 + $0xf4] sm:$0xf]
    %v166 = vld [vmem:[#allocation5 + $0xf8] sm:$0xf]
    %v167 = vld [vmem:[#allocation5 + $0xfc] sm:$0xf]
    %v168 = vld [vmem:[#allocation5 + $0x100] sm:$0xf]
    %v169 = vld [vmem:[#allocation5 + $0x104] sm:$0xf]
    %v170 = vld [vmem:[#allocation5 + $0x108] sm:$0xf]
    %v171 = vld [vmem:[#allocation5 + $0x10c] sm:$0xf]
    %v172 = vld [vmem:[#allocation5 + $0x110] sm:$0xf]
    %v173 = vld [vmem:[#allocation5 + $0x114] sm:$0xf]
    %v174 = vld [vmem:[#allocation5 + $0x118] sm:$0xf]
    %v175 = vld [vmem:[#allocation5 + $0x11c] sm:$0xf]
    %v176 = vld [vmem:[#allocation5 + $0x120] sm:$0xf]
    %v177 = vld [vmem:[#allocation5 + $0x124] sm:$0xf]
    %v178 = vld [vmem:[#allocation5 + $0x128] sm:$0xf]
    %v179 = vld [vmem:[#allocation5 + $0x12c] sm:$0xf]
    %v180 = vld [vmem:[#allocation5 + $0x130] sm:$0xf]
    %v181 = vld [vmem:[#allocation5 + $0x134] sm:$0xf]
    %v182 = vld [vmem:[#allocation5 + $0x138] sm:$0xf]
    %v183 = vld [vmem:[#allocation5 + $0x13c] sm:$0xf]
    %v184 = vld [vmem:[#allocation5 + $0x140] sm:$0xf]
    %v185 = vld [vmem:[#allocation5 + $0x144] sm:$0xf]
    %v186 = vld [vmem:[#allocation5 + $0x148] sm:$0xf]
    %v187 = vld [vmem:[#allocation5 + $0x14c] sm:$0xf]
    %v188 = vld [vmem:[#allocation5 + $0x150] sm:$0xf]
    %v189 = vld [vmem:[#allocation5 + $0x154] sm:$0xf]
    %v190 = vld [vmem:[#allocation5 + $0x158] sm:$0xf]
    %v191 = vld [vmem:[#allocation5 + $0x15c] sm:$0xf]
    %v192 = vld [vmem:[#allocation5 + $0x160] sm:$0xf]
    %v193 = vld [vmem:[#allocation5 + $0x164] sm:$0xf]
    %v194 = vld [vmem:[#allocation5 + $0x168] sm:$0xf]
    %v195 = vld [vmem:[#allocation5 + $0x16c] sm:$0xf]
    %v196 = vld [vmem:[#allocation5 + $0x170] sm:$0xf]
    %v197 = vld [vmem:[#allocation5 + $0x174] sm:$0xf]
    %v198 = vld [vmem:[#allocation5 + $0x178] sm:$0xf]
    %v199 = vld [vmem:[#allocation5 + $0x17c] sm:$0xf]
    %v200 = vld [vmem:[#allocation5 + $0x180] sm:$0xf]
    %v201 = vld [vmem:[#allocation5 + $0x184] sm:$0xf]
    %v202 = vld [vmem:[%s2] sm:$0x1]
    %v204 = vlaneseq
    %v205 = vshrl.u32 %v204, 7
    %v206 = vsub.s32 0, %v205
    %v207 = vrot.slane %v202, %v206
    %v213 = vunpack.c.l.b16 %v100
    %v214 = vunpack.c.h.b16 %v100
    %v215 = vunpack.c.l.b16 %v101
    %v216 = vunpack.c.h.b16 %v101
    %v217 = vunpack.c.l.b16 %v102
    %v218 = vunpack.c.h.b16 %v102
    %v219 = vunpack.c.l.b16 %v103
    %v220 = vpack.c.b16 %v213, %v213
    %v221 = vpack.c.b16 %v214, %v214
    %v222 = vpack.c.b16 %v215, %v215
    %v223 = vpack.c.b16 %v216, %v216
    %v224 = vpack.c.b16 %v217, %v217
    %v225 = vpack.c.b16 %v218, %v218
    %v226 = vpack.c.b16 %v219, %v219
    %v331 = vunpack.c.l.b16 %v104
    %v332 = vunpack.c.l.b16 %v105
    %v333 = vunpack.c.l.b16 %v106
    %v334 = vunpack.c.l.b16 %v107
    %v335 = vunpack.c.l.b16 %v108
    %v336 = vunpack.c.l.b16 %v109
    %v337 = vunpack.c.l.b16 %v110
    %v338 = vunpack.c.l.b16 %v111
    %v339 = vunpack.c.l.b16 %v112
    %v340 = vunpack.c.l.b16 %v113
    %v341 = vunpack.c.l.b16 %v114
    %v342 = vunpack.c.l.b16 %v115
    %v343 = vunpack.c.l.b16 %v116
    %v344 = vunpack.c.l.b16 %v117
    %v345 = vunpack.c.l.b16 %v118
    %v346 = vunpack.c.l.b16 %v119
    %v347 = vunpack.c.l.b16 %v120
    %v348 = vunpack.c.l.b16 %v121
    %v349 = vunpack.c.l.b16 %v122
    %v350 = vunpack.c.l.b16 %v123
    %v351 = vunpack.c.l.b16 %v124
    %v352 = vunpack.c.l.b16 %v125
    %v353 = vunpack.c.l.b16 %v126
    %v354 = vunpack.c.l.b16 %v127
    %v355 = vunpack.c.l.b16 %v128
    %v356 = vunpack.c.l.b16 %v129
    %v357 = vunpack.c.l.b16 %v130
    %v358 = vunpack.c.l.b16 %v131
    %v359 = vunpack.c.l.b16 %v132
    %v360 = vunpack.c.l.b16 %v133
    %v361 = vunpack.c.l.b16 %v134
    %v362 = vunpack.c.l.b16 %v135
    %v363 = vunpack.c.l.b16 %v136
    %v364 = vunpack.c.l.b16 %v137
    %v365 = vunpack.c.l.b16 %v138
    %v366 = vunpack.c.l.b16 %v139
    %v367 = vunpack.c.l.b16 %v140
    %v368 = vunpack.c.l.b16 %v141
    %v369 = vunpack.c.l.b16 %v142
    %v370 = vunpack.c.l.b16 %v143
    %v371 = vunpack.c.l.b16 %v144
    %v372 = vunpack.c.l.b16 %v145
    %v373 = vunpack.c.l.b16 %v146
    %v374 = vunpack.c.l.b16 %v147
    %v375 = vunpack.c.l.b16 %v148
    %v376 = vunpack.c.l.b16 %v149
    %v377 = vunpack.c.l.b16 %v150
    %v378 = vunpack.c.l.b16 %v151
    %v379 = vunpack.c.l.b16 %v152
    %v380 = vunpack.c.l.b16 %v153
    %v381 = vunpack.c.l.b16 %v154
    %v382 = vunpack.c.l.b16 %v155
    %v383 = vunpack.c.l.b16 %v156
    %v384 = vunpack.c.l.b16 %v157
    %v385 = vunpack.c.l.b16 %v158
    %v386 = vunpack.c.l.b16 %v159
    %v387 = vunpack.c.l.b16 %v160
    %v388 = vunpack.c.l.b16 %v161
    %v389 = vunpack.c.l.b16 %v162
    %v390 = vunpack.c.l.b16 %v163
    %v391 = vunpack.c.l.b16 %v164
    %v392 = vunpack.c.l.b16 %v165
    %v393 = vunpack.c.l.b16 %v166
    %v394 = vunpack.c.l.b16 %v167
    %v395 = vunpack.c.l.b16 %v168
    %v396 = vunpack.c.l.b16 %v169
    %v397 = vunpack.c.l.b16 %v170
    %v398 = vunpack.c.l.b16 %v171
    %v399 = vunpack.c.l.b16 %v172
    %v400 = vunpack.c.l.b16 %v173
    %v401 = vunpack.c.l.b16 %v174
    %v402 = vunpack.c.l.b16 %v175
    %v403 = vunpack.c.l.b16 %v176
    %v404 = vunpack.c.l.b16 %v177
    %v405 = vunpack.c.l.b16 %v178
    %v406 = vunpack.c.l.b16 %v179
    %v407 = vunpack.c.l.b16 %v180
    %v408 = vunpack.c.l.b16 %v181
    %v409 = vunpack.c.l.b16 %v182
    %v410 = vunpack.c.l.b16 %v183
    %v411 = vunpack.c.l.b16 %v184
    %v412 = vunpack.c.l.b16 %v185
    %v413 = vunpack.c.l.b16 %v186
    %v414 = vunpack.c.l.b16 %v187
    %v415 = vunpack.c.l.b16 %v188
    %v416 = vunpack.c.l.b16 %v189
    %v417 = vunpack.c.l.b16 %v190
    %v418 = vunpack.c.l.b16 %v191
    %v419 = vunpack.c.l.b16 %v192
    %v420 = vunpack.c.l.b16 %v193
    %v421 = vunpack.c.l.b16 %v194
    %v422 = vunpack.c.l.b16 %v195
    %v423 = vunpack.c.l.b16 %v196
    %v424 = vunpack.c.l.b16 %v197
    %v425 = vunpack.c.l.b16 %v198
    %v426 = vunpack.c.l.b16 %v199
    %v427 = vunpack.c.l.b16 %v200
    %v428 = vunpack.c.l.b16 %v201
    %v429 = vpack.c.b16 %v332, %v331
    %v430 = vpack.c.b16 %v334, %v333
    %v431 = vpack.c.b16 %v336, %v335
    %v432 = vpack.c.b16 %v338, %v337
    %v433 = vpack.c.b16 %v340, %v339
    %v434 = vpack.c.b16 %v342, %v341
    %v435 = vpack.c.b16 %v344, %v343
    %v436 = vpack.c.b16 %v346, %v345
    %v437 = vpack.c.b16 %v348, %v347
    %v438 = vpack.c.b16 %v350, %v349
    %v439 = vpack.c.b16 %v352, %v351
    %v440 = vpack.c.b16 %v354, %v353
    %v441 = vpack.c.b16 %v356, %v355
    %v442 = vpack.c.b16 %v358, %v357
    %v443 = vpack.c.b16 %v360, %v359
    %v444 = vpack.c.b16 %v362, %v361
    %v445 = vpack.c.b16 %v364, %v363
    %v446 = vpack.c.b16 %v366, %v365
    %v447 = vpack.c.b16 %v368, %v367
    %v448 = vpack.c.b16 %v370, %v369
    %v449 = vpack.c.b16 %v372, %v371
    %v450 = vpack.c.b16 %v374, %v373
    %v451 = vpack.c.b16 %v376, %v375
    %v452 = vpack.c.b16 %v378, %v377
    %v453 = vpack.c.b16 %v380, %v379
    %v454 = vpack.c.b16 %v382, %v381
    %v455 = vpack.c.b16 %v384, %v383
    %v456 = vpack.c.b16 %v386, %v385
    %v457 = vpack.c.b16 %v388, %v387
    %v458 = vpack.c.b16 %v390, %v389
    %v459 = vpack.c.b16 %v392, %v391
    %v460 = vpack.c.b16 %v394, %v393
    %v461 = vpack.c.b16 %v396, %v395
    %v462 = vpack.c.b16 %v398, %v397
    %v463 = vpack.c.b16 %v400, %v399
    %v464 = vpack.c.b16 %v402, %v401
    %v465 = vpack.c.b16 %v404, %v403
    %v466 = vpack.c.b16 %v406, %v405
    %v467 = vpack.c.b16 %v408, %v407
    %v468 = vpack.c.b16 %v410, %v409
    %v469 = vpack.c.b16 %v412, %v411
    %v470 = vpack.c.b16 %v414, %v413
    %v471 = vpack.c.b16 %v416, %v415
    %v472 = vpack.c.b16 %v418, %v417
    %v473 = vpack.c.b16 %v420, %v419
    %v474 = vpack.c.b16 %v422, %v421
    %v475 = vpack.c.b16 %v424, %v423
    %v476 = vpack.c.b16 %v426, %v425
    %v477 = vpack.c.b16 %v428, %v427
    %vm527 = vcmask 130048
    %v529 = vsel %vm527, %v226, 0
    %531 = vmatprep.subr.bf16.mxu0 0
    %532 = vmatpush1.bf16.msra.mxu0 %v429
    %533 = vmatprep.subr.bf16.mxu0 0
    %534 = vmatpush1.bf16.msra.mxu0 %v430
    %535 = vmatprep.subr.bf16.mxu0 0
    %536 = vmatpush1.bf16.msra.mxu0 %v431
    %537 = vmatprep.subr.bf16.mxu0 0
    %538 = vmatpush1.bf16.msra.mxu0 %v432
    %539 = vmatprep.subr.bf16.mxu0 0
    %540 = vmatpush1.bf16.msra.mxu0 %v433
    %541 = vmatprep.subr.bf16.mxu0 0
    %542 = vmatpush1.bf16.msra.mxu0 %v434
    %543 = vmatprep.subr.bf16.mxu0 0
    %544 = vmatpush1.bf16.msra.mxu0 %v435
    %545 = vmatprep.subr.bf16.mxu0 0
    %546 = vmatpush1.bf16.msra.mxu0 %v436
    %547 = vmatprep.subr.bf16.mxu0 0
    %548 = vmatpush1.bf16.msra.mxu0 %v437
    %549 = vmatprep.subr.bf16.mxu0 0
    %550 = vmatpush1.bf16.msra.mxu0 %v438
    %551 = vmatprep.subr.bf16.mxu0 0
    %552 = vmatpush1.bf16.msra.mxu0 %v439
    %553 = vmatprep.subr.bf16.mxu0 0
    %554 = vmatpush1.bf16.msra.mxu0 %v440
    %555 = vmatprep.subr.bf16.mxu0 0
    %556 = vmatpush1.bf16.msra.mxu0 %v441
    %557 = vmatprep.subr.bf16.mxu0 0
    %558 = vmatpush1.bf16.msra.mxu0 %v442
    %559 = vmatprep.subr.bf16.mxu0 0
    %560 = vmatpush1.bf16.msra.mxu0 %v443
    %561 = vmatprep.subr.bf16.mxu0 0
    %562 = vmatpush1.bf16.msra.mxu0 %v444
    %563 = vmatprep.mubr.bf16.mxu0 %v221
    %564 = vmatmul.mubr.bf16.gmra.mrb[0].mxu0 %v220
    %v565 = vpop.f32.mrb[0].mxu0
    %v566 = vadd.f32 %v207, %v565
    %v567 = vpop.f32.mrb[0].mxu0
    %v568 = vpop.f32.mrb[0].mxu0
    %v569 = vpop.f32.mrb[0].mxu0
    %570 = vdwg.mxu0
    %571 = vmatprep.subr.bf16.mxu0 0
    %572 = vmatpush1.bf16.msra.mxu0 %v445
    %573 = vmatprep.subr.bf16.mxu0 0
    %574 = vmatpush1.bf16.msra.mxu0 %v446
    %575 = vmatprep.subr.bf16.mxu0 0
    %576 = vmatpush1.bf16.msra.mxu0 %v447
    %577 = vmatprep.subr.bf16.mxu0 0
    %578 = vmatpush1.bf16.msra.mxu0 %v448
    %579 = vmatprep.subr.bf16.mxu0 0
    %580 = vmatpush1.bf16.msra.mxu0 %v449
    %581 = vmatprep.subr.bf16.mxu0 0
    %582 = vmatpush1.bf16.msra.mxu0 %v450
    %583 = vmatprep.subr.bf16.mxu0 0
    %584 = vmatpush1.bf16.msra.mxu0 %v451
    %585 = vmatprep.subr.bf16.mxu0 0
    %586 = vmatpush1.bf16.msra.mxu0 %v452
    %587 = vmatprep.subr.bf16.mxu0 0
    %588 = vmatpush1.bf16.msra.mxu0 %v453
    %589 = vmatprep.subr.bf16.mxu0 0
    %590 = vmatpush1.bf16.msra.mxu0 %v454
    %591 = vmatprep.subr.bf16.mxu0 0
    %592 = vmatpush1.bf16.msra.mxu0 %v455
    %593 = vmatprep.subr.bf16.mxu0 0
    %594 = vmatpush1.bf16.msra.mxu0 %v456
    %595 = vmatprep.subr.bf16.mxu0 0
    %596 = vmatpush1.bf16.msra.mxu0 %v457
    %597 = vmatprep.subr.bf16.mxu0 0
    %598 = vmatpush1.bf16.msra.mxu0 %v458
    %599 = vmatprep.subr.bf16.mxu0 0
    %600 = vmatpush1.bf16.msra.mxu0 %v459
    %601 = vmatprep.subr.bf16.mxu0 0
    %602 = vmatpush1.bf16.msra.mxu0 %v460
    %603 = vmatprep.mubr.bf16.mxu0 %v223
    %604 = vmatmul.mubr.bf16.gmra.mrb[0].mxu0 %v222
    %v605 = vpop.f32.mrb[0].mxu0
    %v606 = vadd.f32 %v566, %v605
    %v607 = vpop.f32.mrb[0].mxu0
    %v608 = vpop.f32.mrb[0].mxu0
    %v609 = vpop.f32.mrb[0].mxu0
    %610 = vdwg.mxu0
    %611 = vmatprep.subr.bf16.mxu0 0
    %612 = vmatpush1.bf16.msra.mxu0 %v461
    %613 = vmatprep.subr.bf16.mxu0 0
    %614 = vmatpush1.bf16.msra.mxu0 %v462
    %615 = vmatprep.subr.bf16.mxu0 0
    %616 = vmatpush1.bf16.msra.mxu0 %v463
    %617 = vmatprep.subr.bf16.mxu0 0
    %618 = vmatpush1.bf16.msra.mxu0 %v464
    %619 = vmatprep.subr.bf16.mxu0 0
    %620 = vmatpush1.bf16.msra.mxu0 %v465
    %621 = vmatprep.subr.bf16.mxu0 0
    %622 = vmatpush1.bf16.msra.mxu0 %v466
    %623 = vmatprep.subr.bf16.mxu0 0
    %624 = vmatpush1.bf16.msra.mxu0 %v467
    %625 = vmatprep.subr.bf16.mxu0 0
    %626 = vmatpush1.bf16.msra.mxu0 %v468
    %627 = vmatprep.subr.bf16.mxu0 0
    %628 = vmatpush1.bf16.msra.mxu0 %v469
    %629 = vmatprep.subr.bf16.mxu0 0
    %630 = vmatpush1.bf16.msra.mxu0 %v470
    %631 = vmatprep.subr.bf16.mxu0 0
    %632 = vmatpush1.bf16.msra.mxu0 %v471
    %633 = vmatprep.subr.bf16.mxu0 0
    %634 = vmatpush1.bf16.msra.mxu0 %v472
    %635 = vmatprep.subr.bf16.mxu0 0
    %636 = vmatpush1.bf16.msra.mxu0 %v473
    %637 = vmatprep.subr.bf16.mxu0 0
    %638 = vmatpush1.bf16.msra.mxu0 %v474
    %639 = vmatprep.subr.bf16.mxu0 0
    %640 = vmatpush1.bf16.msra.mxu0 %v475
    %641 = vmatprep.subr.bf16.mxu0 0
    %642 = vmatpush1.bf16.msra.mxu0 %v476
    %643 = vmatprep.mubr.bf16.mxu0 %v225
    %644 = vmatmul.mubr.bf16.gmra.mrb[0].mxu0 %v224
    %v645 = vpop.f32.mrb[0].mxu0
    %v646 = vadd.f32 %v606, %v645
    %v647 = vpop.f32.mrb[0].mxu0
    %v648 = vpop.f32.mrb[0].mxu0
    %v649 = vpop.f32.mrb[0].mxu0
    %650 = vdwg.mxu0
    %651 = vmatprep.subr.bf16.mxu0 0
    %652 = vmatpush1.bf16.msra.mxu0 %v477
    %653 = vmatprep.subr.bf16.mxu0 0
    %654 = vmatpush1.bf16.msra.mxu0 0
    %655 = vmatprep.subr.bf16.mxu0 0
    %656 = vmatpush1.bf16.msra.mxu0 0
    %657 = vmatprep.subr.bf16.mxu0 0
    %658 = vmatpush1.bf16.msra.mxu0 0
    %659 = vmatprep.subr.bf16.mxu0 0
    %660 = vmatpush1.bf16.msra.mxu0 0
    %661 = vmatprep.subr.bf16.mxu0 0
    %662 = vmatpush1.bf16.msra.mxu0 0
    %663 = vmatprep.subr.bf16.mxu0 0
    %664 = vmatpush1.bf16.msra.mxu0 0
    %665 = vmatprep.subr.bf16.mxu0 0
    %666 = vmatpush1.bf16.msra.mxu0 0
    %667 = vmatprep.subr.bf16.mxu0 0
    %668 = vmatpush1.bf16.msra.mxu0 0
    %669 = vmatprep.subr.bf16.mxu0 0
    %670 = vmatpush1.bf16.msra.mxu0 0
    %671 = vmatprep.subr.bf16.mxu0 0
    %672 = vmatpush1.bf16.msra.mxu0 0
    %673 = vmatprep.subr.bf16.mxu0 0
    %674 = vmatpush1.bf16.msra.mxu0 0
    %675 = vmatprep.subr.bf16.mxu0 0
    %676 = vmatpush1.bf16.msra.mxu0 0
    %677 = vmatprep.subr.bf16.mxu0 0
    %678 = vmatpush1.bf16.msra.mxu0 0
    %679 = vmatprep.subr.bf16.mxu0 0
    %680 = vmatpush1.bf16.msra.mxu0 0
    %681 = vmatprep.subr.bf16.mxu0 0
    %682 = vmatpush1.bf16.msra.mxu0 0
    %683 = vmatprep.mubr.bf16.mxu0 0
    %684 = vmatmul.mubr.bf16.gmra.mrb[0].mxu0 %v529
    %v685 = vpop.f32.mrb[0].mxu0
    %v686 = vadd.f32 %v646, %v685
    %v687 = vpop.f32.mrb[0].mxu0
    %v688 = vpop.f32.mrb[0].mxu0
    %v689 = vpop.f32.mrb[0].mxu0
    %690 = vdwg.mxu0
    %v691 = vmax.f32 %v686, 0.0
    %v692 = vpack.c.bf16 %v691, %v691
    %v693 = vld [vmem:[#allocation7] sm:$0xff]
    %v694 = vld [vmem:[#allocation7 + $0x8] sm:$0xff]
    %v695 = vld [vmem:[#allocation7 + $0x10] sm:$0xff]
    %v696 = vld [vmem:[#allocation7 + $0x18] sm:$0xff]
    %v697 = vld [vmem:[#allocation7 + $0x20] sm:$0xff]
    %v698 = vld [vmem:[#allocation7 + $0x28] sm:$0xff]
    %v699 = vld [vmem:[#allocation7 + $0x30] sm:$0xff]
    %v700 = vld [vmem:[#allocation7 + $0x38] sm:$0xff]
    %v701 = vld [vmem:[#allocation7 + $0x40] sm:$0xff]
    %v702 = vld [vmem:[#allocation7 + $0x48] sm:$0xff]
    %v703 = vld [vmem:[#allocation7 + $0x50] sm:$0xff]
    %v704 = vld [vmem:[#allocation7 + $0x58] sm:$0xff]
    %v705 = vld [vmem:[#allocation7 + $0x60] sm:$0xff]
    %v706 = vld [vmem:[#allocation7 + $0x68] sm:$0xff]
    %v707 = vld [vmem:[#allocation7 + $0x70] sm:$0xff]
    %v708 = vld [vmem:[#allocation7 + $0x78] sm:$0xff]
    %v709 = vld [vmem:[#allocation7 + $0x80] sm:$0xff]
    %v710 = vld [vmem:[#allocation7 + $0x88] sm:$0xff]
    %v711 = vld [vmem:[#allocation7 + $0x90] sm:$0xff]
    %v712 = vld [vmem:[#allocation7 + $0x98] sm:$0xff]
    %v713 = vld [vmem:[#allocation7 + $0xa0] sm:$0xff]
    %v714 = vld [vmem:[#allocation7 + $0xa8] sm:$0xff]
    %v715 = vld [vmem:[#allocation7 + $0xb0] sm:$0xff]
    %v716 = vld [vmem:[#allocation7 + $0xb8] sm:$0xff]
    %v717 = vld [vmem:[#allocation7 + $0xc0] sm:$0xff]
    %v718 = vld [vmem:[#allocation7 + $0xc8] sm:$0xff]
    %v719 = vld [vmem:[#allocation7 + $0xd0] sm:$0xff]
    %v720 = vld [vmem:[#allocation7 + $0xd8] sm:$0xff]
    %v721 = vld [vmem:[#allocation7 + $0xe0] sm:$0xff]
    %v722 = vld [vmem:[#allocation7 + $0xe8] sm:$0xff]
    %v723 = vld [vmem:[#allocation7 + $0xf0] sm:$0xff]
    %v724 = vld [vmem:[#allocation7 + $0xf8] sm:$0xff]
    %v725 = vld [vmem:[%s4] sm:$0xf]
    %v727 = vlaneseq
    %v728 = vshrl.u32 %v727, 7
    %v729 = vsub.s32 0, %v728
    %v730 = vrot.slane %v725, %v729
    %v731 = vlaneseq
    %v732 = vshrl.u32 %v731, 7
    %v733 = vsub.s32 1, %v732
    %v734 = vrot.slane %v725, %v733
    %v735 = vlaneseq
    %v736 = vshrl.u32 %v735, 7
    %v737 = vsub.s32 2, %v736
    %v738 = vrot.slane %v725, %v737
    %v739 = vlaneseq
    %v740 = vshrl.u32 %v739, 7
    %v741 = vsub.s32 3, %v740
    %v742 = vrot.slane %v725, %v741
    %v779 = vunpack.c.l.b16 %v693
    %v780 = vunpack.c.h.b16 %v693
    %v781 = vunpack.c.l.b16 %v694
    %v782 = vunpack.c.h.b16 %v694
    %v783 = vunpack.c.l.b16 %v695
    %v784 = vunpack.c.h.b16 %v695
    %v785 = vunpack.c.l.b16 %v696
    %v786 = vunpack.c.h.b16 %v696
    %v787 = vunpack.c.l.b16 %v697
    %v788 = vunpack.c.h.b16 %v697
    %v789 = vunpack.c.l.b16 %v698
    %v790 = vunpack.c.h.b16 %v698
    %v791 = vunpack.c.l.b16 %v699
    %v792 = vunpack.c.h.b16 %v699
    %v793 = vunpack.c.l.b16 %v700
    %v794 = vunpack.c.h.b16 %v700
    %v795 = vunpack.c.l.b16 %v701
    %v796 = vunpack.c.h.b16 %v701
    %v797 = vunpack.c.l.b16 %v702
    %v798 = vunpack.c.h.b16 %v702
    %v799 = vunpack.c.l.b16 %v703
    %v800 = vunpack.c.h.b16 %v703
    %v801 = vunpack.c.l.b16 %v704
    %v802 = vunpack.c.h.b16 %v704
    %v803 = vunpack.c.l.b16 %v705
    %v804 = vunpack.c.h.b16 %v705
    %v805 = vunpack.c.l.b16 %v706
    %v806 = vunpack.c.h.b16 %v706
    %v807 = vunpack.c.l.b16 %v707
    %v808 = vunpack.c.h.b16 %v707
    %v809 = vunpack.c.l.b16 %v708
    %v810 = vunpack.c.h.b16 %v708
    %v811 = vunpack.c.l.b16 %v709
    %v812 = vunpack.c.h.b16 %v709
    %v813 = vunpack.c.l.b16 %v710
    %v814 = vunpack.c.h.b16 %v710
    %v815 = vunpack.c.l.b16 %v711
    %v816 = vunpack.c.h.b16 %v711
    %v817 = vunpack.c.l.b16 %v712
    %v818 = vunpack.c.h.b16 %v712
    %v819 = vunpack.c.l.b16 %v713
    %v820 = vunpack.c.h.b16 %v713
    %v821 = vunpack.c.l.b16 %v714
    %v822 = vunpack.c.h.b16 %v714
    %v823 = vunpack.c.l.b16 %v715
    %v824 = vunpack.c.h.b16 %v715
    %v825 = vunpack.c.l.b16 %v716
    %v826 = vunpack.c.h.b16 %v716
    %v827 = vunpack.c.l.b16 %v717
    %v828 = vunpack.c.h.b16 %v717
    %v829 = vunpack.c.l.b16 %v718
    %v830 = vunpack.c.h.b16 %v718
    %v831 = vunpack.c.l.b16 %v719
    %v832 = vunpack.c.h.b16 %v719
    %v833 = vunpack.c.l.b16 %v720
    %v834 = vunpack.c.h.b16 %v720
    %v835 = vunpack.c.l.b16 %v721
    %v836 = vunpack.c.h.b16 %v721
    %v837 = vunpack.c.l.b16 %v722
    %v838 = vunpack.c.h.b16 %v722
    %v839 = vunpack.c.l.b16 %v723
    %v840 = vunpack.c.h.b16 %v723
    %v841 = vunpack.c.l.b16 %v724
    %v842 = vunpack.c.h.b16 %v724
    %v843 = vpack.c.b16 %v783, %v779
    %v844 = vpack.c.b16 %v784, %v780
    %v845 = vpack.c.b16 %v785, %v781
    %v846 = vpack.c.b16 %v786, %v782
    %v847 = vpack.c.b16 %v791, %v787
    %v848 = vpack.c.b16 %v792, %v788
    %v849 = vpack.c.b16 %v793, %v789
    %v850 = vpack.c.b16 %v794, %v790
    %v851 = vpack.c.b16 %v799, %v795
    %v852 = vpack.c.b16 %v800, %v796
    %v853 = vpack.c.b16 %v801, %v797
    %v854 = vpack.c.b16 %v802, %v798
    %v855 = vpack.c.b16 %v807, %v803
    %v856 = vpack.c.b16 %v808, %v804
    %v857 = vpack.c.b16 %v809, %v805
    %v858 = vpack.c.b16 %v810, %v806
    %v859 = vpack.c.b16 %v815, %v811
    %v860 = vpack.c.b16 %v816, %v812
    %v861 = vpack.c.b16 %v817, %v813
    %v862 = vpack.c.b16 %v818, %v814
    %v863 = vpack.c.b16 %v823, %v819
    %v864 = vpack.c.b16 %v824, %v820
    %v865 = vpack.c.b16 %v825, %v821
    %v866 = vpack.c.b16 %v826, %v822
    %v867 = vpack.c.b16 %v831, %v827
    %v868 = vpack.c.b16 %v832, %v828
    %v869 = vpack.c.b16 %v833, %v829
    %v870 = vpack.c.b16 %v834, %v830
    %v871 = vpack.c.b16 %v839, %v835
    %v872 = vpack.c.b16 %v840, %v836
    %v873 = vpack.c.b16 %v841, %v837
    %v874 = vpack.c.b16 %v842, %v838
    %907 = vmatprep.subr.bf16.mxu0 %v844
    %908 = vmatpush1.bf16.msra.mxu0 %v843
    %909 = vmatprep.subr.bf16.mxu0 %v848
    %910 = vmatpush1.bf16.msra.mxu0 %v847
    %911 = vmatprep.subr.bf16.mxu0 %v852
    %912 = vmatpush1.bf16.msra.mxu0 %v851
    %913 = vmatprep.subr.bf16.mxu0 %v856
    %914 = vmatpush1.bf16.msra.mxu0 %v855
    %915 = vmatprep.subr.bf16.mxu0 %v860
    %916 = vmatpush1.bf16.msra.mxu0 %v859
    %917 = vmatprep.subr.bf16.mxu0 %v864
    %918 = vmatpush1.bf16.msra.mxu0 %v863
    %919 = vmatprep.subr.bf16.mxu0 %v868
    %920 = vmatpush1.bf16.msra.mxu0 %v867
    %921 = vmatprep.subr.bf16.mxu0 %v872
    %922 = vmatpush1.bf16.msra.mxu0 %v871
    %923 = vmatprep.subr.bf16.mxu0 0
    %924 = vmatpush1.bf16.msra.mxu0 0
    %925 = vmatprep.subr.bf16.mxu0 0
    %926 = vmatpush1.bf16.msra.mxu0 0
    %927 = vmatprep.subr.bf16.mxu0 0
    %928 = vmatpush1.bf16.msra.mxu0 0
    %929 = vmatprep.subr.bf16.mxu0 0
    %930 = vmatpush1.bf16.msra.mxu0 0
    %931 = vmatprep.subr.bf16.mxu0 0
    %932 = vmatpush1.bf16.msra.mxu0 0
    %933 = vmatprep.subr.bf16.mxu0 0
    %934 = vmatpush1.bf16.msra.mxu0 0
    %935 = vmatprep.subr.bf16.mxu0 0
    %936 = vmatpush1.bf16.msra.mxu0 0
    %937 = vmatprep.subr.bf16.mxu0 0
    %938 = vmatpush1.bf16.msra.mxu0 0
    %939 = vmatprep.mubr.bf16.mxu0 0
    %940 = vmatmul.mubr.bf16.gmra.mrb[0].mxu0 %v692
    %v941 = vpop.f32.mrb[0].mxu0
    %v942 = vadd.f32 %v730, %v941
    %v943 = vpop.f32.mrb[0].mxu0
    %v944 = vadd.f32 %v734, %v943
    %v945 = vpop.f32.mrb[0].mxu0
    %v946 = vpop.f32.mrb[0].mxu0
    %947 = vdwg.mxu0
    %948 = vmatprep.subr.bf16.mxu0 %v846
    %949 = vmatpush1.bf16.msra.mxu0 %v845
    %950 = vmatprep.subr.bf16.mxu0 %v850
    %951 = vmatpush1.bf16.msra.mxu0 %v849
    %952 = vmatprep.subr.bf16.mxu0 %v854
    %953 = vmatpush1.bf16.msra.mxu0 %v853
    %954 = vmatprep.subr.bf16.mxu0 %v858
    %955 = vmatpush1.bf16.msra.mxu0 %v857
    %956 = vmatprep.subr.bf16.mxu0 %v862
    %957 = vmatpush1.bf16.msra.mxu0 %v861
    %958 = vmatprep.subr.bf16.mxu0 %v866
    %959 = vmatpush1.bf16.msra.mxu0 %v865
    %960 = vmatprep.subr.bf16.mxu0 %v870
    %961 = vmatpush1.bf16.msra.mxu0 %v869
    %962 = vmatprep.subr.bf16.mxu0 %v874
    %963 = vmatpush1.bf16.msra.mxu0 %v873
    %964 = vmatprep.subr.bf16.mxu0 0
    %965 = vmatpush1.bf16.msra.mxu0 0
    %966 = vmatprep.subr.bf16.mxu0 0
    %967 = vmatpush1.bf16.msra.mxu0 0
    %968 = vmatprep.subr.bf16.mxu0 0
    %969 = vmatpush1.bf16.msra.mxu0 0
    %970 = vmatprep.subr.bf16.mxu0 0
    %971 = vmatpush1.bf16.msra.mxu0 0
    %972 = vmatprep.subr.bf16.mxu0 0
    %973 = vmatpush1.bf16.msra.mxu0 0
    %974 = vmatprep.subr.bf16.mxu0 0
    %975 = vmatpush1.bf16.msra.mxu0 0
    %976 = vmatprep.subr.bf16.mxu0 0
    %977 = vmatpush1.bf16.msra.mxu0 0
    %978 = vmatprep.subr.bf16.mxu0 0
    %979 = vmatpush1.bf16.msra.mxu0 0
    %980 = vmatprep.mubr.bf16.mxu0 0
    %981 = vmatmul.mubr.bf16.gmra.mrb[0].mxu0 %v692
    %v982 = vpop.f32.mrb[0].mxu0
    %v983 = vadd.f32 %v738, %v982
    %v984 = vpop.f32.mrb[0].mxu0
    %v985 = vadd.f32 %v742, %v984
    %v986 = vpop.f32.mrb[0].mxu0
    %v987 = vpop.f32.mrb[0].mxu0
    %988 = vdwg.mxu0
    %v989 = vmax.f32 %v942, 0.0
    %v990 = vmax.f32 %v944, 0.0
    %v991 = vmax.f32 %v983, 0.0
    %v992 = vmax.f32 %v985, 0.0
    %v993 = vpack.c.bf16 %v989, %v989
    %v994 = vpack.c.bf16 %v990, %v990
    %v995 = vpack.c.bf16 %v991, %v991
    %v996 = vpack.c.bf16 %v992, %v992
    %v997 = vld [vmem:[#allocation8] sm:$0xff]
    %v998 = vld [vmem:[#allocation8 + $0x8] sm:$0xff]
    %v999 = vld [vmem:[#allocation8 + $0x10] sm:$0xff]
    %v1000 = vld [vmem:[#allocation8 + $0x18] sm:$0xff]
    %v1001 = vld [vmem:[#allocation8 + $0x20] sm:$0xff]
    %v1002 = vld [vmem:[#allocation8 + $0x28] sm:$0xff]
    %v1003 = vld [vmem:[#allocation8 + $0x30] sm:$0xff]
    %v1004 = vld [vmem:[#allocation8 + $0x38] sm:$0xff]
    %v1005 = vld [vmem:[#allocation8 + $0x40] sm:$0xff]
    %v1006 = vld [vmem:[#allocation8 + $0x48] sm:$0xff]
    %v1007 = vld [vmem:[#allocation8 + $0x50] sm:$0xff]
    %v1008 = vld [vmem:[#allocation8 + $0x58] sm:$0xff]
    %v1009 = vld [vmem:[#allocation8 + $0x60] sm:$0xff]
    %v1010 = vld [vmem:[#allocation8 + $0x68] sm:$0xff]
    %v1011 = vld [vmem:[#allocation8 + $0x70] sm:$0xff]
    %v1012 = vld [vmem:[#allocation8 + $0x78] sm:$0xff]
    %v1013 = vld [vmem:[#allocation8 + $0x80] sm:$0xff]
    %v1014 = vld [vmem:[#allocation8 + $0x88] sm:$0xff]
    %v1015 = vld [vmem:[#allocation8 + $0x90] sm:$0xff]
    %v1016 = vld [vmem:[#allocation8 + $0x98] sm:$0xff]
    %v1017 = vld [vmem:[#allocation8 + $0xa0] sm:$0xff]
    %v1018 = vld [vmem:[#allocation8 + $0xa8] sm:$0xff]
    %v1019 = vld [vmem:[#allocation8 + $0xb0] sm:$0xff]
    %v1020 = vld [vmem:[#allocation8 + $0xb8] sm:$0xff]
    %v1021 = vld [vmem:[#allocation8 + $0xc0] sm:$0xff]
    %v1022 = vld [vmem:[#allocation8 + $0xc8] sm:$0xff]
    %v1023 = vld [vmem:[#allocation8 + $0xd0] sm:$0xff]
    %v1024 = vld [vmem:[#allocation8 + $0xd8] sm:$0xff]
    %v1025 = vld [vmem:[#allocation8 + $0xe0] sm:$0xff]
    %v1026 = vld [vmem:[#allocation8 + $0xe8] sm:$0xff]
    %v1027 = vld [vmem:[#allocation8 + $0xf0] sm:$0xff]
    %v1028 = vld [vmem:[#allocation8 + $0xf8] sm:$0xff]
    %v1029 = vld [vmem:[#allocation8 + $0x100] sm:$0xff]
    %v1030 = vld [vmem:[#allocation8 + $0x108] sm:$0xff]
    %v1031 = vld [vmem:[#allocation8 + $0x110] sm:$0xff]
    %v1032 = vld [vmem:[#allocation8 + $0x118] sm:$0xff]
    %v1033 = vld [vmem:[#allocation8 + $0x120] sm:$0xff]
    %v1034 = vld [vmem:[#allocation8 + $0x128] sm:$0xff]
    %v1035 = vld [vmem:[#allocation8 + $0x130] sm:$0xff]
    %v1036 = vld [vmem:[#allocation8 + $0x138] sm:$0xff]
    %v1037 = vld [vmem:[#allocation8 + $0x140] sm:$0xff]
    %v1038 = vld [vmem:[#allocation8 + $0x148] sm:$0xff]
    %v1039 = vld [vmem:[#allocation8 + $0x150] sm:$0xff]
    %v1040 = vld [vmem:[#allocation8 + $0x158] sm:$0xff]
    %v1041 = vld [vmem:[#allocation8 + $0x160] sm:$0xff]
    %v1042 = vld [vmem:[#allocation8 + $0x168] sm:$0xff]
    %v1043 = vld [vmem:[#allocation8 + $0x170] sm:$0xff]
    %v1044 = vld [vmem:[#allocation8 + $0x178] sm:$0xff]
    %v1045 = vld [vmem:[#allocation8 + $0x180] sm:$0xff]
    %v1046 = vld [vmem:[#allocation8 + $0x188] sm:$0xff]
    %v1047 = vld [vmem:[#allocation8 + $0x190] sm:$0xff]
    %v1048 = vld [vmem:[#allocation8 + $0x198] sm:$0xff]
    %v1049 = vld [vmem:[#allocation8 + $0x1a0] sm:$0xff]
    %v1050 = vld [vmem:[#allocation8 + $0x1a8] sm:$0xff]
    %v1051 = vld [vmem:[#allocation8 + $0x1b0] sm:$0xff]
    %v1052 = vld [vmem:[#allocation8 + $0x1b8] sm:$0xff]
    %v1053 = vld [vmem:[#allocation8 + $0x1c0] sm:$0xff]
    %v1054 = vld [vmem:[#allocation8 + $0x1c8] sm:$0xff]
    %v1055 = vld [vmem:[#allocation8 + $0x1d0] sm:$0xff]
    %v1056 = vld [vmem:[#allocation8 + $0x1d8] sm:$0xff]
    %v1057 = vld [vmem:[#allocation8 + $0x1e0] sm:$0xff]
    %v1058 = vld [vmem:[#allocation8 + $0x1e8] sm:$0xff]
    %v1059 = vld [vmem:[#allocation8 + $0x1f0] sm:$0xff]
    %v1060 = vld [vmem:[#allocation8 + $0x1f8] sm:$0xff]
    %v1061 = vld [vmem:[%s6] sm:$0x3]
    %v1063 = vlaneseq
    %v1064 = vshrl.u32 %v1063, 7
    %v1065 = vsub.s32 0, %v1064
    %v1066 = vrot.slane %v1061, %v1065
    %v1067 = vlaneseq
    %v1068 = vshrl.u32 %v1067, 7
    %v1069 = vsub.s32 1, %v1068
    %v1070 = vrot.slane %v1061, %v1069
    %v1137 = vunpack.c.l.b16 %v997
    %v1138 = vunpack.c.h.b16 %v997
    %v1139 = vunpack.c.l.b16 %v998
    %v1140 = vunpack.c.h.b16 %v998
    %v1141 = vunpack.c.l.b16 %v999
    %v1142 = vunpack.c.h.b16 %v999
    %v1143 = vunpack.c.l.b16 %v1000
    %v1144 = vunpack.c.h.b16 %v1000
    %v1145 = vunpack.c.l.b16 %v1001
    %v1146 = vunpack.c.h.b16 %v1001
    %v1147 = vunpack.c.l.b16 %v1002
    %v1148 = vunpack.c.h.b16 %v1002
    %v1149 = vunpack.c.l.b16 %v1003
    %v1150 = vunpack.c.h.b16 %v1003
    %v1151 = vunpack.c.l.b16 %v1004
    %v1152 = vunpack.c.h.b16 %v1004
    %v1153 = vunpack.c.l.b16 %v1005
    %v1154 = vunpack.c.h.b16 %v1005
    %v1155 = vunpack.c.l.b16 %v1006
    %v1156 = vunpack.c.h.b16 %v1006
    %v1157 = vunpack.c.l.b16 %v1007
    %v1158 = vunpack.c.h.b16 %v1007
    %v1159 = vunpack.c.l.b16 %v1008
    %v1160 = vunpack.c.h.b16 %v1008
    %v1161 = vunpack.c.l.b16 %v1009
    %v1162 = vunpack.c.h.b16 %v1009
    %v1163 = vunpack.c.l.b16 %v1010
    %v1164 = vunpack.c.h.b16 %v1010
    %v1165 = vunpack.c.l.b16 %v1011
    %v1166 = vunpack.c.h.b16 %v1011
    %v1167 = vunpack.c.l.b16 %v1012
    %v1168 = vunpack.c.h.b16 %v1012
    %v1169 = vunpack.c.l.b16 %v1013
    %v1170 = vunpack.c.h.b16 %v1013
    %v1171 = vunpack.c.l.b16 %v1014
    %v1172 = vunpack.c.h.b16 %v1014
    %v1173 = vunpack.c.l.b16 %v1015
    %v1174 = vunpack.c.h.b16 %v1015
    %v1175 = vunpack.c.l.b16 %v1016
    %v1176 = vunpack.c.h.b16 %v1016
    %v1177 = vunpack.c.l.b16 %v1017
    %v1178 = vunpack.c.h.b16 %v1017
    %v1179 = vunpack.c.l.b16 %v1018
    %v1180 = vunpack.c.h.b16 %v1018
    %v1181 = vunpack.c.l.b16 %v1019
    %v1182 = vunpack.c.h.b16 %v1019
    %v1183 = vunpack.c.l.b16 %v1020
    %v1184 = vunpack.c.h.b16 %v1020
    %v1185 = vunpack.c.l.b16 %v1021
    %v1186 = vunpack.c.h.b16 %v1021
    %v1187 = vunpack.c.l.b16 %v1022
    %v1188 = vunpack.c.h.b16 %v1022
    %v1189 = vunpack.c.l.b16 %v1023
    %v1190 = vunpack.c.h.b16 %v1023
    %v1191 = vunpack.c.l.b16 %v1024
    %v1192 = vunpack.c.h.b16 %v1024
    %v1193 = vunpack.c.l.b16 %v1025
    %v1194 = vunpack.c.h.b16 %v1025
    %v1195 = vunpack.c.l.b16 %v1026
    %v1196 = vunpack.c.h.b16 %v1026
    %v1197 = vunpack.c.l.b16 %v1027
    %v1198 = vunpack.c.h.b16 %v1027
    %v1199 = vunpack.c.l.b16 %v1028
    %v1200 = vunpack.c.h.b16 %v1028
    %v1201 = vunpack.c.l.b16 %v1029
    %v1202 = vunpack.c.h.b16 %v1029
    %v1203 = vunpack.c.l.b16 %v1030
    %v1204 = vunpack.c.h.b16 %v1030
    %v1205 = vunpack.c.l.b16 %v1031
    %v1206 = vunpack.c.h.b16 %v1031
    %v1207 = vunpack.c.l.b16 %v1032
    %v1208 = vunpack.c.h.b16 %v1032
    %v1209 = vunpack.c.l.b16 %v1033
    %v1210 = vunpack.c.h.b16 %v1033
    %v1211 = vunpack.c.l.b16 %v1034
    %v1212 = vunpack.c.h.b16 %v1034
    %v1213 = vunpack.c.l.b16 %v1035
    %v1214 = vunpack.c.h.b16 %v1035
    %v1215 = vunpack.c.l.b16 %v1036
    %v1216 = vunpack.c.h.b16 %v1036
    %v1217 = vunpack.c.l.b16 %v1037
    %v1218 = vunpack.c.h.b16 %v1037
    %v1219 = vunpack.c.l.b16 %v1038
    %v1220 = vunpack.c.h.b16 %v1038
    %v1221 = vunpack.c.l.b16 %v1039
    %v1222 = vunpack.c.h.b16 %v1039
    %v1223 = vunpack.c.l.b16 %v1040
    %v1224 = vunpack.c.h.b16 %v1040
    %v1225 = vunpack.c.l.b16 %v1041
    %v1226 = vunpack.c.h.b16 %v1041
    %v1227 = vunpack.c.l.b16 %v1042
    %v1228 = vunpack.c.h.b16 %v1042
    %v1229 = vunpack.c.l.b16 %v1043
    %v1230 = vunpack.c.h.b16 %v1043
    %v1231 = vunpack.c.l.b16 %v1044
    %v1232 = vunpack.c.h.b16 %v1044
    %v1233 = vunpack.c.l.b16 %v1045
    %v1234 = vunpack.c.h.b16 %v1045
    %v1235 = vunpack.c.l.b16 %v1046
    %v1236 = vunpack.c.h.b16 %v1046
    %v1237 = vunpack.c.l.b16 %v1047
    %v1238 = vunpack.c.h.b16 %v1047
    %v1239 = vunpack.c.l.b16 %v1048
    %v1240 = vunpack.c.h.b16 %v1048
    %v1241 = vunpack.c.l.b16 %v1049
    %v1242 = vunpack.c.h.b16 %v1049
    %v1243 = vunpack.c.l.b16 %v1050
    %v1244 = vunpack.c.h.b16 %v1050
    %v1245 = vunpack.c.l.b16 %v1051
    %v1246 = vunpack.c.h.b16 %v1051
    %v1247 = vunpack.c.l.b16 %v1052
    %v1248 = vunpack.c.h.b16 %v1052
    %v1249 = vunpack.c.l.b16 %v1053
    %v1250 = vunpack.c.h.b16 %v1053
    %v1251 = vunpack.c.l.b16 %v1054
    %v1252 = vunpack.c.h.b16 %v1054
    %v1253 = vunpack.c.l.b16 %v1055
    %v1254 = vunpack.c.h.b16 %v1055
    %v1255 = vunpack.c.l.b16 %v1056
    %v1256 = vunpack.c.h.b16 %v1056
    %v1257 = vunpack.c.l.b16 %v1057
    %v1258 = vunpack.c.h.b16 %v1057
    %v1259 = vunpack.c.l.b16 %v1058
    %v1260 = vunpack.c.h.b16 %v1058
    %v1261 = vunpack.c.l.b16 %v1059
    %v1262 = vunpack.c.h.b16 %v1059
    %v1263 = vunpack.c.l.b16 %v1060
    %v1264 = vunpack.c.h.b16 %v1060
    %v1265 = vpack.c.b16 %v1139, %v1137
    %v1266 = vpack.c.b16 %v1140, %v1138
    %v1267 = vpack.c.b16 %v1143, %v1141
    %v1268 = vpack.c.b16 %v1144, %v1142
    %v1269 = vpack.c.b16 %v1147, %v1145
    %v1270 = vpack.c.b16 %v1148, %v1146
    %v1271 = vpack.c.b16 %v1151, %v1149
    %v1272 = vpack.c.b16 %v1152, %v1150
    %v1273 = vpack.c.b16 %v1155, %v1153
    %v1274 = vpack.c.b16 %v1156, %v1154
    %v1275 = vpack.c.b16 %v1159, %v1157
    %v1276 = vpack.c.b16 %v1160, %v1158
    %v1277 = vpack.c.b16 %v1163, %v1161
    %v1278 = vpack.c.b16 %v1164, %v1162
    %v1279 = vpack.c.b16 %v1167, %v1165
    %v1280 = vpack.c.b16 %v1168, %v1166
    %v1281 = vpack.c.b16 %v1171, %v1169
    %v1282 = vpack.c.b16 %v1172, %v1170
    %v1283 = vpack.c.b16 %v1175, %v1173
    %v1284 = vpack.c.b16 %v1176, %v1174
    %v1285 = vpack.c.b16 %v1179, %v1177
    %v1286 = vpack.c.b16 %v1180, %v1178
    %v1287 = vpack.c.b16 %v1183, %v1181
    %v1288 = vpack.c.b16 %v1184, %v1182
    %v1289 = vpack.c.b16 %v1187, %v1185
    %v1290 = vpack.c.b16 %v1188, %v1186
    %v1291 = vpack.c.b16 %v1191, %v1189
    %v1292 = vpack.c.b16 %v1192, %v1190
    %v1293 = vpack.c.b16 %v1195, %v1193
    %v1294 = vpack.c.b16 %v1196, %v1194
    %v1295 = vpack.c.b16 %v1199, %v1197
    %v1296 = vpack.c.b16 %v1200, %v1198
    %v1297 = vpack.c.b16 %v1203, %v1201
    %v1298 = vpack.c.b16 %v1204, %v1202
    %v1299 = vpack.c.b16 %v1207, %v1205
    %v1300 = vpack.c.b16 %v1208, %v1206
    %v1301 = vpack.c.b16 %v1211, %v1209
    %v1302 = vpack.c.b16 %v1212, %v1210
    %v1303 = vpack.c.b16 %v1215, %v1213
    %v1304 = vpack.c.b16 %v1216, %v1214
    %v1305 = vpack.c.b16 %v1219, %v1217
    %v1306 = vpack.c.b16 %v1220, %v1218
    %v1307 = vpack.c.b16 %v1223, %v1221
    %v1308 = vpack.c.b16 %v1224, %v1222
    %v1309 = vpack.c.b16 %v1227, %v1225
    %v1310 = vpack.c.b16 %v1228, %v1226
    %v1311 = vpack.c.b16 %v1231, %v1229
    %v1312 = vpack.c.b16 %v1232, %v1230
    %v1313 = vpack.c.b16 %v1235, %v1233
    %v1314 = vpack.c.b16 %v1236, %v1234
    %v1315 = vpack.c.b16 %v1239, %v1237
    %v1316 = vpack.c.b16 %v1240, %v1238
    %v1317 = vpack.c.b16 %v1243, %v1241
    %v1318 = vpack.c.b16 %v1244, %v1242
    %v1319 = vpack.c.b16 %v1247, %v1245
    %v1320 = vpack.c.b16 %v1248, %v1246
    %v1321 = vpack.c.b16 %v1251, %v1249
    %v1322 = vpack.c.b16 %v1252, %v1250
    %v1323 = vpack.c.b16 %v1255, %v1253
    %v1324 = vpack.c.b16 %v1256, %v1254
    %v1325 = vpack.c.b16 %v1259, %v1257
    %v1326 = vpack.c.b16 %v1260, %v1258
    %v1327 = vpack.c.b16 %v1263, %v1261
    %v1328 = vpack.c.b16 %v1264, %v1262
    %1393 = vmatprep.subr.bf16.mxu0 %v1266
    %1394 = vmatpush1.bf16.msra.mxu0 %v1265
    %1395 = vmatprep.subr.bf16.mxu0 %v1268
    %1396 = vmatpush1.bf16.msra.mxu0 %v1267
    %1397 = vmatprep.subr.bf16.mxu0 %v1270
    %1398 = vmatpush1.bf16.msra.mxu0 %v1269
    %1399 = vmatprep.subr.bf16.mxu0 %v1272
    %1400 = vmatpush1.bf16.msra.mxu0 %v1271
    %1401 = vmatprep.subr.bf16.mxu0 %v1274
    %1402 = vmatpush1.bf16.msra.mxu0 %v1273
    %1403 = vmatprep.subr.bf16.mxu0 %v1276
    %1404 = vmatpush1.bf16.msra.mxu0 %v1275
    %1405 = vmatprep.subr.bf16.mxu0 %v1278
    %1406 = vmatpush1.bf16.msra.mxu0 %v1277
    %1407 = vmatprep.subr.bf16.mxu0 %v1280
    %1408 = vmatpush1.bf16.msra.mxu0 %v1279
    %1409 = vmatprep.subr.bf16.mxu0 %v1282
    %1410 = vmatpush1.bf16.msra.mxu0 %v1281
    %1411 = vmatprep.subr.bf16.mxu0 %v1284
    %1412 = vmatpush1.bf16.msra.mxu0 %v1283
    %1413 = vmatprep.subr.bf16.mxu0 %v1286
    %1414 = vmatpush1.bf16.msra.mxu0 %v1285
    %1415 = vmatprep.subr.bf16.mxu0 %v1288
    %1416 = vmatpush1.bf16.msra.mxu0 %v1287
    %1417 = vmatprep.subr.bf16.mxu0 %v1290
    %1418 = vmatpush1.bf16.msra.mxu0 %v1289
    %1419 = vmatprep.subr.bf16.mxu0 %v1292
    %1420 = vmatpush1.bf16.msra.mxu0 %v1291
    %1421 = vmatprep.subr.bf16.mxu0 %v1294
    %1422 = vmatpush1.bf16.msra.mxu0 %v1293
    %1423 = vmatprep.subr.bf16.mxu0 %v1296
    %1424 = vmatpush1.bf16.msra.mxu0 %v1295
    %1425 = vmatprep.mubr.bf16.mxu0 %v994
    %1426 = vmatmul.mubr.bf16.gmra.mrb[0].mxu0 %v993
    %v1427 = vpop.f32.mrb[0].mxu0
    %v1428 = vadd.f32 %v1066, %v1427
    %v1429 = vpop.f32.mrb[0].mxu0
    %v1430 = vadd.f32 %v1070, %v1429
    %v1431 = vpop.f32.mrb[0].mxu0
    %v1432 = vpop.f32.mrb[0].mxu0
    %1433 = vdwg.mxu0
    %1434 = vmatprep.subr.bf16.mxu0 %v1298
    %1435 = vmatpush1.bf16.msra.mxu0 %v1297
    %1436 = vmatprep.subr.bf16.mxu0 %v1300
    %1437 = vmatpush1.bf16.msra.mxu0 %v1299
    %1438 = vmatprep.subr.bf16.mxu0 %v1302
    %1439 = vmatpush1.bf16.msra.mxu0 %v1301
    %1440 = vmatprep.subr.bf16.mxu0 %v1304
    %1441 = vmatpush1.bf16.msra.mxu0 %v1303
    %1442 = vmatprep.subr.bf16.mxu0 %v1306
    %1443 = vmatpush1.bf16.msra.mxu0 %v1305
    %1444 = vmatprep.subr.bf16.mxu0 %v1308
    %1445 = vmatpush1.bf16.msra.mxu0 %v1307
    %1446 = vmatprep.subr.bf16.mxu0 %v1310
    %1447 = vmatpush1.bf16.msra.mxu0 %v1309
    %1448 = vmatprep.subr.bf16.mxu0 %v1312
    %1449 = vmatpush1.bf16.msra.mxu0 %v1311
    %1450 = vmatprep.subr.bf16.mxu0 %v1314
    %1451 = vmatpush1.bf16.msra.mxu0 %v1313
    %1452 = vmatprep.subr.bf16.mxu0 %v1316
    %1453 = vmatpush1.bf16.msra.mxu0 %v1315
    %1454 = vmatprep.subr.bf16.mxu0 %v1318
    %1455 = vmatpush1.bf16.msra.mxu0 %v1317
    %1456 = vmatprep.subr.bf16.mxu0 %v1320
    %1457 = vmatpush1.bf16.msra.mxu0 %v1319
    %1458 = vmatprep.subr.bf16.mxu0 %v1322
    %1459 = vmatpush1.bf16.msra.mxu0 %v1321
    %1460 = vmatprep.subr.bf16.mxu0 %v1324
    %1461 = vmatpush1.bf16.msra.mxu0 %v1323
    %1462 = vmatprep.subr.bf16.mxu0 %v1326
    %1463 = vmatpush1.bf16.msra.mxu0 %v1325
    %1464 = vmatprep.subr.bf16.mxu0 %v1328
    %1465 = vmatpush1.bf16.msra.mxu0 %v1327
    %1466 = vmatprep.mubr.bf16.mxu0 %v996
    %1467 = vmatmul.mubr.bf16.gmra.mrb[0].mxu0 %v995
    %v1468 = vpop.f32.mrb[0].mxu0
    %v1469 = vadd.f32 %v1428, %v1468
    %v1470 = vpop.f32.mrb[0].mxu0
    %v1471 = vadd.f32 %v1430, %v1470
    %v1472 = vpop.f32.mrb[0].mxu0
    %v1473 = vpop.f32.mrb[0].mxu0
    %1474 = vdwg.mxu0
    %v1475 = vmax.f32 %v1469, 0.0
    %v1476 = vmax.f32 %v1471, 0.0
    %v1477 = vpack.c.bf16 %v1475, %v1475
    %v1478 = vpack.c.bf16 %v1476, %v1476
    %v1479 = vld [vmem:[#allocation10] sm:$0xf]
    %v1480 = vld [vmem:[#allocation10 + $0x4] sm:$0xf]
    %v1481 = vld [vmem:[#allocation10 + $0x8] sm:$0xf]
    %v1482 = vld [vmem:[#allocation10 + $0xc] sm:$0xf]
    %v1483 = vld [vmem:[#allocation10 + $0x10] sm:$0xf]
    %v1484 = vld [vmem:[#allocation10 + $0x14] sm:$0xf]
    %v1485 = vld [vmem:[#allocation10 + $0x18] sm:$0xf]
    %v1486 = vld [vmem:[#allocation10 + $0x1c] sm:$0xf]
    %v1487 = vld [vmem:[#allocation10 + $0x20] sm:$0xf]
    %v1488 = vld [vmem:[#allocation10 + $0x24] sm:$0xf]
    %v1489 = vld [vmem:[#allocation10 + $0x28] sm:$0xf]
    %v1490 = vld [vmem:[#allocation10 + $0x2c] sm:$0xf]
    %v1491 = vld [vmem:[#allocation10 + $0x30] sm:$0xf]
    %v1492 = vld [vmem:[#allocation10 + $0x34] sm:$0xf]
    %v1493 = vld [vmem:[#allocation10 + $0x38] sm:$0xf]
    %v1494 = vld [vmem:[#allocation10 + $0x3c] sm:$0xf]
    %v1495 = vld [vmem:[#allocation10 + $0x40] sm:$0xf]
    %v1496 = vld [vmem:[#allocation10 + $0x44] sm:$0xf]
    %v1497 = vld [vmem:[#allocation10 + $0x48] sm:$0xf]
    %v1498 = vld [vmem:[#allocation10 + $0x4c] sm:$0xf]
    %v1499 = vld [vmem:[#allocation10 + $0x50] sm:$0xf]
    %v1500 = vld [vmem:[#allocation10 + $0x54] sm:$0xf]
    %v1501 = vld [vmem:[#allocation10 + $0x58] sm:$0xf]
    %v1502 = vld [vmem:[#allocation10 + $0x5c] sm:$0xf]
    %v1503 = vld [vmem:[#allocation10 + $0x60] sm:$0xf]
    %v1504 = vld [vmem:[#allocation10 + $0x64] sm:$0xf]
    %v1505 = vld [vmem:[#allocation10 + $0x68] sm:$0xf]
    %v1506 = vld [vmem:[#allocation10 + $0x6c] sm:$0xf]
    %v1507 = vld [vmem:[#allocation10 + $0x70] sm:$0xf]
    %v1508 = vld [vmem:[#allocation10 + $0x74] sm:$0xf]
    %v1509 = vld [vmem:[#allocation10 + $0x78] sm:$0xf]
    %v1510 = vld [vmem:[#allocation10 + $0x7c] sm:$0xf]
    %v1511 = vld [vmem:[%s8] sm:$0x1]
    %v1513 = vlaneseq
    %v1514 = vshrl.u32 %v1513, 7
    %v1515 = vsub.s32 0, %v1514
    %v1516 = vrot.slane %v1511, %v1515
    %v1550 = vunpack.c.l.b16 %v1479
    %v1551 = vunpack.c.l.b16 %v1480
    %v1552 = vunpack.c.l.b16 %v1481
    %v1553 = vunpack.c.l.b16 %v1482
    %v1554 = vunpack.c.l.b16 %v1483
    %v1555 = vunpack.c.l.b16 %v1484
    %v1556 = vunpack.c.l.b16 %v1485
    %v1557 = vunpack.c.l.b16 %v1486
    %v1558 = vunpack.c.l.b16 %v1487
    %v1559 = vunpack.c.l.b16 %v1488
    %v1560 = vunpack.c.l.b16 %v1489
    %v1561 = vunpack.c.l.b16 %v1490
    %v1562 = vunpack.c.l.b16 %v1491
    %v1563 = vunpack.c.l.b16 %v1492
    %v1564 = vunpack.c.l.b16 %v1493
    %v1565 = vunpack.c.l.b16 %v1494
    %v1566 = vunpack.c.l.b16 %v1495
    %v1567 = vunpack.c.l.b16 %v1496
    %v1568 = vunpack.c.l.b16 %v1497
    %v1569 = vunpack.c.l.b16 %v1498
    %v1570 = vunpack.c.l.b16 %v1499
    %v1571 = vunpack.c.l.b16 %v1500
    %v1572 = vunpack.c.l.b16 %v1501
    %v1573 = vunpack.c.l.b16 %v1502
    %v1574 = vunpack.c.l.b16 %v1503
    %v1575 = vunpack.c.l.b16 %v1504
    %v1576 = vunpack.c.l.b16 %v1505
    %v1577 = vunpack.c.l.b16 %v1506
    %v1578 = vunpack.c.l.b16 %v1507
    %v1579 = vunpack.c.l.b16 %v1508
    %v1580 = vunpack.c.l.b16 %v1509
    %v1581 = vunpack.c.l.b16 %v1510
    %v1582 = vpack.c.b16 %v1551, %v1550
    %v1583 = vpack.c.b16 %v1553, %v1552
    %v1584 = vpack.c.b16 %v1555, %v1554
    %v1585 = vpack.c.b16 %v1557, %v1556
    %v1586 = vpack.c.b16 %v1559, %v1558
    %v1587 = vpack.c.b16 %v1561, %v1560
    %v1588 = vpack.c.b16 %v1563, %v1562
    %v1589 = vpack.c.b16 %v1565, %v1564
    %v1590 = vpack.c.b16 %v1567, %v1566
    %v1591 = vpack.c.b16 %v1569, %v1568
    %v1592 = vpack.c.b16 %v1571, %v1570
    %v1593 = vpack.c.b16 %v1573, %v1572
    %v1594 = vpack.c.b16 %v1575, %v1574
    %v1595 = vpack.c.b16 %v1577, %v1576
    %v1596 = vpack.c.b16 %v1579, %v1578
    %v1597 = vpack.c.b16 %v1581, %v1580
    %1614 = vmatprep.subr.bf16.mxu0 0
    %1615 = vmatpush1.bf16.msra.mxu0 %v1582
    %1616 = vmatprep.subr.bf16.mxu0 0
    %1617 = vmatpush1.bf16.msra.mxu0 %v1583
    %1618 = vmatprep.subr.bf16.mxu0 0
    %1619 = vmatpush1.bf16.msra.mxu0 %v1584
    %1620 = vmatprep.subr.bf16.mxu0 0
    %1621 = vmatpush1.bf16.msra.mxu0 %v1585
    %1622 = vmatprep.subr.bf16.mxu0 0
    %1623 = vmatpush1.bf16.msra.mxu0 %v1586
    %1624 = vmatprep.subr.bf16.mxu0 0
    %1625 = vmatpush1.bf16.msra.mxu0 %v1587
    %1626 = vmatprep.subr.bf16.mxu0 0
    %1627 = vmatpush1.bf16.msra.mxu0 %v1588
    %1628 = vmatprep.subr.bf16.mxu0 0
    %1629 = vmatpush1.bf16.msra.mxu0 %v1589
    %1630 = vmatprep.subr.bf16.mxu0 0
    %1631 = vmatpush1.bf16.msra.mxu0 %v1590
    %1632 = vmatprep.subr.bf16.mxu0 0
    %1633 = vmatpush1.bf16.msra.mxu0 %v1591
    %1634 = vmatprep.subr.bf16.mxu0 0
    %1635 = vmatpush1.bf16.msra.mxu0 %v1592
    %1636 = vmatprep.subr.bf16.mxu0 0
    %1637 = vmatpush1.bf16.msra.mxu0 %v1593
    %1638 = vmatprep.subr.bf16.mxu0 0
    %1639 = vmatpush1.bf16.msra.mxu0 %v1594
    %1640 = vmatprep.subr.bf16.mxu0 0
    %1641 = vmatpush1.bf16.msra.mxu0 %v1595
    %1642 = vmatprep.subr.bf16.mxu0 0
    %1643 = vmatpush1.bf16.msra.mxu0 %v1596
    %1644 = vmatprep.subr.bf16.mxu0 0
    %1645 = vmatpush1.bf16.msra.mxu0 %v1597
    %1646 = vmatprep.mubr.bf16.mxu0 %v1478
    %1647 = vmatmul.mubr.bf16.gmra.mrb[0].mxu0 %v1477
    %v1648 = vpop.f32.mrb[0].mxu0
    %v1649 = vadd.f32 %v1516, %v1648
    %v1650 = vpop.f32.mrb[0].mxu0
    %v1651 = vpop.f32.mrb[0].mxu0
    %v1652 = vpop.f32.mrb[0].mxu0
    %1653 = vdwg.mxu0
    %1654 = vst [vmem:[#allocation11] sm:$0xff] %v1649
    // Predicated region
    $region58: #{tpu_custom_call.1} parent=1 // pred_check
      _
    $region59: #{tpu_custom_call.1} parent=1 // pred_check_branch
      %1656 = sbr.rel (0) target = $region61
    $region60: #{tpu_custom_call.1} parent=1 // pred_region
      %s1658 = ssub.s32 128, 128
      %1659 = vsyncadd [#allocation4], %s1658
      %s1661 = sshll.u32 [#allocation11], 4
      %s1662 = int_to_ptr.vmem [resolvable:$true] %s1661
      %1664 = dma.vmem_to_hbm [thread:$0]  %s1662, 128, %s9, [#allocation4]
    $region61: #{tpu_custom_call.1} parent=1 // pred_fallthru
      _
    // Predicated region
    $region62: #{tpu_custom_call.1} parent=1 // pred_check
      _
    $region63: #{tpu_custom_call.1} parent=1 // pred_check_branch
      %1666 = sbr.rel (0) target = $region65
    $region64: #{tpu_custom_call.1} parent=1 // pred_region
      %1667 = dma.done [#allocation4], 128
    $region65: #{tpu_custom_call.1} parent=1 // pred_fallthru
      _
    %1668 = vsyncpa [#allocation3], 1
    %1669 = vsyncpa [#allocation6], 1
    %1670 = vsyncpa [#allocation9], 1
    %1671 = vsyncpa [#allocation4], 1

</llo_original>
